<compile_context>
chip_gen: v5e
topology: v5e:2x2
jax: 0.10.0
libtpu: 0.0.40
codegen_flags: <defaults>
</compile_context>

<pallas_src>
import functools

import jax
import jax.numpy as jnp
from jax import lax
from jax.experimental import pallas as pl
from jax.experimental.pallas import tpu as pltpu  # noqa: F401  (TPU backend)


# ----------------------------------------------------------------------------
# Fused Pallas kernel: lstm1 (fwd+bwd fused) -> lstm2 (fwd + 1-step bwd) -> fc
# ----------------------------------------------------------------------------
def _fused_bilstm_kernel(T, B, H1, H2,
                         x_ref,
                         w1f_ih_ref, w1b_ih_ref, b1f_ref, b1b_ref,
                         w1_hh_cat_ref,
                         w2f_ih_ref, w2f_hh_ref, b2f_ref,
                         w2b_ih_ref, b2b_ref,
                         wfc_ref, bfc_ref,
                         out_ref):
    f32 = jnp.float32
    G1 = 4 * H1                                      # per-direction gate width

    def lstm_cell(gates, c_prev, H):
        i = jax.nn.sigmoid(gates[:, 0:H])
        f = jax.nn.sigmoid(gates[:, H:2 * H])
        g = jnp.tanh(gates[:, 2 * H:3 * H])
        o = jax.nn.sigmoid(gates[:, 3 * H:4 * H])
        c = f * c_prev + i * g
        h = o * jnp.tanh(c)
        return h, c

    x = x_ref[...]                                   # (T*B, I), time-major flat

    # ---------------- layer 1 ----------------
    # Hoisted input projections (time-independent): one matmul per direction,
    # M = T*B instead of B on the MXU; biases folded in here once.
    gx1f = jnp.dot(x, w1f_ih_ref[...], preferred_element_type=f32) + b1f_ref[...]
    gx1b = jnp.dot(x, w1b_ih_ref[...], preferred_element_type=f32) + b1b_ref[...]

    # Block-diagonal recurrent weight: rows 0:H1 -> fwd gates (cols 0:4H1),
    # rows H1:2H1 -> bwd gates (cols 4H1:8H1).  One matmul drives BOTH
    # direction recurrences per step.
    w1_hh_cat = w1_hh_cat_ref[...]                   # (2H1, 8H1)

    zeros1 = jnp.zeros((B, H1), f32)
    cf = cb = zeros1
    h_cat = jnp.zeros((B, 2 * H1), f32)              # [hf | hb]
    hf_hist = [None] * T                             # fwd hidden at time t
    hb_hist = [None] * T                             # bwd hidden at time t
    for s in range(T):                               # static unroll (T small)
        tf, tb = s, T - 1 - s                        # fwd walks 0..T-1, bwd T-1..0
        gx = jnp.concatenate(
            [gx1f[tf * B:(tf + 1) * B, :], gx1b[tb * B:(tb + 1) * B, :]], axis=1)
        gates = gx + jnp.dot(h_cat, w1_hh_cat, preferred_element_type=f32)
        hf, cf = lstm_cell(gates[:, 0:G1], cf, H1)           # vreg-aligned split
        hb, cb = lstm_cell(gates[:, G1:2 * G1], cb, H1)
        hf_hist[tf] = hf
        hb_hist[tb] = hb
        h_cat = jnp.concatenate([hf, hb], axis=1)

    # layer-1 output, time-major flat: out1[t] = [hf(t) | hb(t)]  -> (T*B, 2H1)
    out1 = jnp.concatenate(
        [jnp.concatenate([hf_hist[t], hb_hist[t]], axis=1) for t in range(T)],
        axis=0)

    # ---------------- layer 2 ----------------
    # Forward: only the final hidden is consumed -> no output storage.
    gx2f = jnp.dot(out1, w2f_ih_ref[...], preferred_element_type=f32) + b2f_ref[...]
    w2f_hh = w2f_hh_ref[...]
    zeros2 = jnp.zeros((B, H2), f32)
    h2f = c2f = zeros2
    for t in range(T):
        gates = gx2f[t * B:(t + 1) * B, :] + jnp.dot(
            h2f, w2f_hh, preferred_element_type=f32)
        h2f, c2f = lstm_cell(gates, c2f, H2)

    # Backward: only its value at original time T-1 is consumed, i.e. its
    # FIRST recurrence step from zero (h, c) on input out1[T-1]; the recurrent
    # matmul vanishes (h_prev = 0), so W2b_hh is never needed.
    gates_b = jnp.dot(out1[(T - 1) * B:T * B, :], w2b_ih_ref[...],
                      preferred_element_type=f32) + b2b_ref[...]
    h2b, _ = lstm_cell(gates_b, zeros2, H2)

    # ---------------- fused FC ----------------
    h2_cat = jnp.concatenate([h2f, h2b], axis=1)     # (B, 2H2)
    out_ref[...] = (jnp.dot(h2_cat, wfc_ref[...], preferred_element_type=f32)
                    + bfc_ref[...])


# ----------------------------------------------------------------------------
# Wrapper
# ----------------------------------------------------------------------------
def bicustom_lstm_forward(x_bti, params):
    B, T, I = x_bti.shape
    H1 = params["l1_fwd"][1].shape[0]
    H2 = params["l2_fwd"][1].shape[0]
    OUT = params["fc_w"].shape[1]

    # batch-first -> time-major, flattened to (T*B, I) so the hoisted input
    # projection is a single 2-D MXU matmul inside the kernel.
    x_flat = jnp.transpose(x_bti, (1, 0, 2)).reshape(T * B, I)

    w1f_ih, w1f_hh, b1f = params["l1_fwd"]
    w1b_ih, w1b_hh, b1b = params["l1_bwd"]
    w2f_ih, w2f_hh, b2f = params["l2_fwd"]
    w2b_ih, _w2b_hh, b2b = params["l2_bwd"]          # W2b_hh unused (see kernel)

    # Block-diagonal layer-1 recurrent weight so fwd+bwd share one matmul/step.
    z = jnp.zeros((H1, 4 * H1), jnp.float32)
    w1_hh_cat = jnp.concatenate(
        [jnp.concatenate([w1f_hh, z], axis=1),
         jnp.concatenate([z, w1b_hh], axis=1)], axis=0)     # (2H1, 8H1)

    kernel = functools.partial(_fused_bilstm_kernel, T, B, H1, H2)
    # No grid / no BlockSpecs: single invocation, every operand mapped whole
    # into VMEM (total footprint is a few tens of KB), single (B, OUT) output.
    return pl.pallas_call(
        kernel,
        out_shape=jax.ShapeDtypeStruct((B, OUT), jnp.float32),
    )(x_flat,
      w1f_ih, w1b_ih, b1f, b1b,
      w1_hh_cat,
      w2f_ih, w2f_hh, b2f,
      w2b_ih, b2b,
      params["fc_w"], params["fc_b"].reshape(1, OUT))


# ----------------------------------------------------------------------------
# Deterministic parameter init (PyTorch nn.LSTM / nn.Linear shapes + U(-k, k))
# ----------------------------------------------------------------------------
def init_lstm_dir_params(key, input_size, hidden_size):
    k1, k2, k3, k4 = jax.random.split(key, 4)
    bound = 1.0 / (hidden_size ** 0.5)
    w_ih = jax.random.uniform(k1, (4 * hidden_size, input_size),
                              minval=-bound, maxval=bound, dtype=jnp.float32)
    w_hh = jax.random.uniform(k2, (4 * hidden_size, hidden_size),
                              minval=-bound, maxval=bound, dtype=jnp.float32)
    b_ih = jax.random.uniform(k3, (4 * hidden_size,),
                              minval=-bound, maxval=bound, dtype=jnp.float32)
    b_hh = jax.random.uniform(k4, (4 * hidden_size,),
                              minval=-bound, maxval=bound, dtype=jnp.float32)
    # kernel layout: (I, 4H), (H, 4H), (1, 4H)
    return (w_ih.T, w_hh.T, (b_ih + b_hh).reshape(1, -1))


def init_params(key, input_size, h1, h2, output_size):
    ks = jax.random.split(key, 6)
    fc_bound = 1.0 / ((2 * h2) ** 0.5)
    fc_w = jax.random.uniform(ks[4], (output_size, 2 * h2),
                              minval=-fc_bound, maxval=fc_bound, dtype=jnp.float32)
    fc_b = jax.random.uniform(ks[5], (output_size,),
                              minval=-fc_bound, maxval=fc_bound, dtype=jnp.float32)
    return {
        "l1_fwd": init_lstm_dir_params(ks[0], input_size, h1),
        "l1_bwd": init_lstm_dir_params(ks[1], input_size, h1),
        "l2_fwd": init_lstm_dir_params(ks[2], 2 * h1, h2),
        "l2_bwd": init_lstm_dir_params(ks[3], 2 * h1, h2),
        "fc_w": fc_w.T,           # (2*h2, output_size)
        "fc_b": fc_b,
    }


# ----------------------------------------------------------------------------
# Pure-JAX reference (same math) for a correctness check
# ----------------------------------------------------------------------------
def _lstm_dir_ref(x_tbi, w_ih, w_hh, b, reverse):
    T, B, _ = x_tbi.shape
    H = w_hh.shape[0]
    xs = x_tbi[::-1] if reverse else x_tbi

    def step(carry, x_t):
        h, c = carry
        gates = x_t @ w_ih + h @ w_hh + b
        i = jax.nn.sigmoid(gates[:, 0:H])
        f = jax.nn.sigmoid(gates[:, H:2 * H])
        g = jnp.tanh(gates[:, 2 * H:3 * H])
        o = jax.nn.sigmoid(gates[:, 3 * H:4 * H])
        c = f * c + i * g
        h = o * jnp.tanh(c)
        return (h, c), h

    init = (jnp.zeros((B, H), jnp.float32), jnp.zeros((B, H), jnp.float32))
    _, hs = lax.scan(step, init, xs)
    return hs[::-1] if reverse else hs


def _forward_ref(x_bti, params):
    x_tbi = jnp.transpose(x_bti, (1, 0, 2))
    o1 = jnp.concatenate([_lstm_dir_ref(x_tbi, *params["l1_fwd"], False),
                          _lstm_dir_ref(x_tbi, *params["l1_bwd"], True)], axis=-1)
    o2 = jnp.concatenate([_lstm_dir_ref(o1, *params["l2_fwd"], False),
                          _lstm_dir_ref(o1, *params["l2_bwd"], True)], axis=-1)
    return o2[-1] @ params["fc_w"] + params["fc_b"]


# ----------------------------------------------------------------------------
if __name__ == "__main__":
    B, T, INPUT, H1, H2, OUT = 2, 8, 16, 32, 32, 8

    key = jax.random.PRNGKey(0)
    k_x, k_p = jax.random.split(key)
    x = jax.random.normal(k_x, (B, T, INPUT), dtype=jnp.float32)
    params = init_params(k_p, INPUT, H1, H2, OUT)

    out = jax.jit(bicustom_lstm_forward)(x, params)
    out = jax.block_until_ready(out)
    assert out.shape == (B, OUT)

    ref = _forward_ref(x, params)
    assert jnp.allclose(out, ref, atol=1e-4, rtol=1e-4), (
        f"max abs diff {jnp.max(jnp.abs(out - ref))}")

    print("KERNEL_OK")
</pallas_src>

<mosaic_0001>
module attributes {stable_mosaic.version = 11 : i64} {
  func.func @_fused_bilstm_kernel(%arg0: memref<16x16xf32, #tpu.memory_space<vmem>>, %arg1: memref<16x128xf32, #tpu.memory_space<vmem>>, %arg2: memref<16x128xf32, #tpu.memory_space<vmem>>, %arg3: memref<1x128xf32, #tpu.memory_space<vmem>>, %arg4: memref<1x128xf32, #tpu.memory_space<vmem>>, %arg5: memref<64x256xf32, #tpu.memory_space<vmem>>, %arg6: memref<64x128xf32, #tpu.memory_space<vmem>>, %arg7: memref<32x128xf32, #tpu.memory_space<vmem>>, %arg8: memref<1x128xf32, #tpu.memory_space<vmem>>, %arg9: memref<64x128xf32, #tpu.memory_space<vmem>>, %arg10: memref<1x128xf32, #tpu.memory_space<vmem>>, %arg11: memref<64x8xf32, #tpu.memory_space<vmem>>, %arg12: memref<1x8xf32, #tpu.memory_space<vmem>>, %arg13: memref<2x8xf32, #tpu.memory_space<vmem>>) attributes {dimension_semantics = [], scalar_prefetch = 0 : i64, scratch_operands = 0 : i64, tpu.core_type = #tpu.core_type<tc>} {
    %c0 = arith.constant 0 : index
    %c0_0 = arith.constant 0 : index
    %0 = vector.load %arg0[%c0, %c0_0] : memref<16x16xf32, #tpu.memory_space<vmem>>, vector<16x16xf32>
    %c0_1 = arith.constant 0 : index
    %c0_2 = arith.constant 0 : index
    %1 = vector.load %arg1[%c0_1, %c0_2] : memref<16x128xf32, #tpu.memory_space<vmem>>, vector<16x128xf32>
    %cst = arith.constant dense<0.000000e+00> : vector<16x128xf32>
    %2 = tpu.matmul %0, %1, %cst {dimension_numbers = #tpu.dot_dimension_numbers<[1], [0], [0], [1], [0, 0, 1, 1], [], []>} : vector<16x16xf32>, vector<16x128xf32>, vector<16x128xf32> -> vector<16x128xf32>
    %c0_3 = arith.constant 0 : index
    %c0_4 = arith.constant 0 : index
    %3 = vector.load %arg3[%c0_3, %c0_4] : memref<1x128xf32, #tpu.memory_space<vmem>>, vector<1x128xf32>
    %4 = vector.broadcast %3 : vector<1x128xf32> to vector<16x128xf32>
    %5 = arith.addf %2, %4 : vector<16x128xf32>
    %c0_5 = arith.constant 0 : index
    %c0_6 = arith.constant 0 : index
    %6 = vector.load %arg2[%c0_5, %c0_6] : memref<16x128xf32, #tpu.memory_space<vmem>>, vector<16x128xf32>
    %cst_7 = arith.constant dense<0.000000e+00> : vector<16x128xf32>
    %7 = tpu.matmul %0, %6, %cst_7 {dimension_numbers = #tpu.dot_dimension_numbers<[1], [0], [0], [1], [0, 0, 1, 1], [], []>} : vector<16x16xf32>, vector<16x128xf32>, vector<16x128xf32> -> vector<16x128xf32>
    %c0_8 = arith.constant 0 : index
    %c0_9 = arith.constant 0 : index
    %8 = vector.load %arg4[%c0_8, %c0_9] : memref<1x128xf32, #tpu.memory_space<vmem>>, vector<1x128xf32>
    %9 = vector.broadcast %8 : vector<1x128xf32> to vector<16x128xf32>
    %10 = arith.addf %7, %9 : vector<16x128xf32>
    %c0_10 = arith.constant 0 : index
    %c0_11 = arith.constant 0 : index
    %11 = vector.load %arg5[%c0_10, %c0_11] : memref<64x256xf32, #tpu.memory_space<vmem>>, vector<64x256xf32>
    %cst_12 = arith.constant 0.000000e+00 : f32
    %12 = vector.broadcast %cst_12 : f32 to vector<2x32xf32>
    %cst_13 = arith.constant 0.000000e+00 : f32
    %13 = vector.broadcast %cst_13 : f32 to vector<2x64xf32>
    %14 = vector.extract_strided_slice %5 {offsets = [0, 0], sizes = [2, 128], strides = [1, 1]} : vector<16x128xf32> to vector<2x128xf32>
    %15 = vector.extract_strided_slice %10 {offsets = [14, 0], sizes = [2, 128], strides = [1, 1]} : vector<16x128xf32> to vector<2x128xf32>
    %16 = tpu.concatenate %14, %15 in 1 : vector<2x128xf32>, vector<2x128xf32> -> vector<2x256xf32>
    %cst_14 = arith.constant dense<0.000000e+00> : vector<2x256xf32>
    %17 = tpu.matmul %13, %11, %cst_14 {dimension_numbers = #tpu.dot_dimension_numbers<[1], [0], [0], [1], [0, 0, 1, 1], [], []>} : vector<2x64xf32>, vector<64x256xf32>, vector<2x256xf32> -> vector<2x256xf32>
    %18 = arith.addf %16, %17 : vector<2x256xf32>
    %19 = vector.extract_strided_slice %18 {offsets = [0, 0], sizes = [2, 128], strides = [1, 1]} : vector<2x256xf32> to vector<2x128xf32>
    %20 = vector.extract_strided_slice %19 {offsets = [0, 0], sizes = [2, 32], strides = [1, 1]} : vector<2x128xf32> to vector<2x32xf32>
    %21 = arith.negf %20 : vector<2x32xf32>
    %22 = math.exp %21 : vector<2x32xf32>
    %cst_15 = arith.constant 1.000000e+00 : f32
    %23 = vector.broadcast %cst_15 : f32 to vector<2x32xf32>
    %24 = arith.addf %23, %22 : vector<2x32xf32>
    %25 = arith.divf %23, %24 : vector<2x32xf32>
    %26 = vector.extract_strided_slice %19 {offsets = [0, 32], sizes = [2, 32], strides = [1, 1]} : vector<2x128xf32> to vector<2x32xf32>
    %27 = arith.negf %26 : vector<2x32xf32>
    %28 = math.exp %27 : vector<2x32xf32>
    %cst_16 = arith.constant 1.000000e+00 : f32
    %29 = vector.broadcast %cst_16 : f32 to vector<2x32xf32>
    %30 = arith.addf %29, %28 : vector<2x32xf32>
    %31 = arith.divf %29, %30 : vector<2x32xf32>
    %32 = vector.extract_strided_slice %19 {offsets = [0, 64], sizes = [2, 32], strides = [1, 1]} : vector<2x128xf32> to vector<2x32xf32>
    %33 = math.tanh %32 : vector<2x32xf32>
    %34 = vector.extract_strided_slice %19 {offsets = [0, 96], sizes = [2, 32], strides = [1, 1]} : vector<2x128xf32> to vector<2x32xf32>
    %35 = arith.negf %34 : vector<2x32xf32>
    %36 = math.exp %35 : vector<2x32xf32>
    %cst_17 = arith.constant 1.000000e+00 : f32
    %37 = vector.broadcast %cst_17 : f32 to vector<2x32xf32>
    %38 = arith.addf %37, %36 : vector<2x32xf32>
    %39 = arith.divf %37, %38 : vector<2x32xf32>
    %40 = arith.mulf %31, %12 : vector<2x32xf32>
    %41 = arith.mulf %25, %33 : vector<2x32xf32>
    %42 = arith.addf %40, %41 : vector<2x32xf32>
    %43 = math.tanh %42 : vector<2x32xf32>
    %44 = arith.mulf %39, %43 : vector<2x32xf32>
    %45 = vector.extract_strided_slice %18 {offsets = [0, 128], sizes = [2, 128], strides = [1, 1]} : vector<2x256xf32> to vector<2x128xf32>
    %46 = vector.extract_strided_slice %45 {offsets = [0, 0], sizes = [2, 32], strides = [1, 1]} : vector<2x128xf32> to vector<2x32xf32>
    %47 = arith.negf %46 : vector<2x32xf32>
    %48 = math.exp %47 : vector<2x32xf32>
    %cst_18 = arith.constant 1.000000e+00 : f32
    %49 = vector.broadcast %cst_18 : f32 to vector<2x32xf32>
    %50 = arith.addf %49, %48 : vector<2x32xf32>
    %51 = arith.divf %49, %50 : vector<2x32xf32>
    %52 = vector.extract_strided_slice %45 {offsets = [0, 32], sizes = [2, 32], strides = [1, 1]} : vector<2x128xf32> to vector<2x32xf32>
    %53 = arith.negf %52 : vector<2x32xf32>
    %54 = math.exp %53 : vector<2x32xf32>
    %cst_19 = arith.constant 1.000000e+00 : f32
    %55 = vector.broadcast %cst_19 : f32 to vector<2x32xf32>
    %56 = arith.addf %55, %54 : vector<2x32xf32>
    %57 = arith.divf %55, %56 : vector<2x32xf32>
    %58 = vector.extract_strided_slice %45 {offsets = [0, 64], sizes = [2, 32], strides = [1, 1]} : vector<2x128xf32> to vector<2x32xf32>
    %59 = math.tanh %58 : vector<2x32xf32>
    %60 = vector.extract_strided_slice %45 {offsets = [0, 96], sizes = [2, 32], strides = [1, 1]} : vector<2x128xf32> to vector<2x32xf32>
    %61 = arith.negf %60 : vector<2x32xf32>
    %62 = math.exp %61 : vector<2x32xf32>
    %cst_20 = arith.constant 1.000000e+00 : f32
    %63 = vector.broadcast %cst_20 : f32 to vector<2x32xf32>
    %64 = arith.addf %63, %62 : vector<2x32xf32>
    %65 = arith.divf %63, %64 : vector<2x32xf32>
    %66 = arith.mulf %57, %12 : vector<2x32xf32>
    %67 = arith.mulf %51, %59 : vector<2x32xf32>
    %68 = arith.addf %66, %67 : vector<2x32xf32>
    %69 = math.tanh %68 : vector<2x32xf32>
    %70 = arith.mulf %65, %69 : vector<2x32xf32>
    %71 = tpu.concatenate %44, %70 in 1 : vector<2x32xf32>, vector<2x32xf32> -> vector<2x64xf32>
    %72 = vector.extract_strided_slice %5 {offsets = [2, 0], sizes = [2, 128], strides = [1, 1]} : vector<16x128xf32> to vector<2x128xf32>
    %73 = vector.extract_strided_slice %10 {offsets = [12, 0], sizes = [2, 128], strides = [1, 1]} : vector<16x128xf32> to vector<2x128xf32>
    %74 = tpu.concatenate %72, %73 in 1 : vector<2x128xf32>, vector<2x128xf32> -> vector<2x256xf32>
    %cst_21 = arith.constant dense<0.000000e+00> : vector<2x256xf32>
    %75 = tpu.matmul %71, %11, %cst_21 {dimension_numbers = #tpu.dot_dimension_numbers<[1], [0], [0], [1], [0, 0, 1, 1], [], []>} : vector<2x64xf32>, vector<64x256xf32>, vector<2x256xf32> -> vector<2x256xf32>
    %76 = arith.addf %74, %75 : vector<2x256xf32>
    %77 = vector.extract_strided_slice %76 {offsets = [0, 0], sizes = [2, 128], strides = [1, 1]} : vector<2x256xf32> to vector<2x128xf32>
    %78 = vector.extract_strided_slice %77 {offsets = [0, 0], sizes = [2, 32], strides = [1, 1]} : vector<2x128xf32> to vector<2x32xf32>
    %79 = arith.negf %78 : vector<2x32xf32>
    %80 = math.exp %79 : vector<2x32xf32>
    %cst_22 = arith.constant 1.000000e+00 : f32
    %81 = vector.broadcast %cst_22 : f32 to vector<2x32xf32>
    %82 = arith.addf %81, %80 : vector<2x32xf32>
    %83 = arith.divf %81, %82 : vector<2x32xf32>
    %84 = vector.extract_strided_slice %77 {offsets = [0, 32], sizes = [2, 32], strides = [1, 1]} : vector<2x128xf32> to vector<2x32xf32>
    %85 = arith.negf %84 : vector<2x32xf32>
    %86 = math.exp %85 : vector<2x32xf32>
    %cst_23 = arith.constant 1.000000e+00 : f32
    %87 = vector.broadcast %cst_23 : f32 to vector<2x32xf32>
    %88 = arith.addf %87, %86 : vector<2x32xf32>
    %89 = arith.divf %87, %88 : vector<2x32xf32>
    %90 = vector.extract_strided_slice %77 {offsets = [0, 64], sizes = [2, 32], strides = [1, 1]} : vector<2x128xf32> to vector<2x32xf32>
    %91 = math.tanh %90 : vector<2x32xf32>
    %92 = vector.extract_strided_slice %77 {offsets = [0, 96], sizes = [2, 32], strides = [1, 1]} : vector<2x128xf32> to vector<2x32xf32>
    %93 = arith.negf %92 : vector<2x32xf32>
    %94 = math.exp %93 : vector<2x32xf32>
    %cst_24 = arith.constant 1.000000e+00 : f32
    %95 = vector.broadcast %cst_24 : f32 to vector<2x32xf32>
    %96 = arith.addf %95, %94 : vector<2x32xf32>
    %97 = arith.divf %95, %96 : vector<2x32xf32>
    %98 = arith.mulf %89, %42 : vector<2x32xf32>
    %99 = arith.mulf %83, %91 : vector<2x32xf32>
    %100 = arith.addf %98, %99 : vector<2x32xf32>
    %101 = math.tanh %100 : vector<2x32xf32>
    %102 = arith.mulf %97, %101 : vector<2x32xf32>
    %103 = vector.extract_strided_slice %76 {offsets = [0, 128], sizes = [2, 128], strides = [1, 1]} : vector<2x256xf32> to vector<2x128xf32>
    %104 = vector.extract_strided_slice %103 {offsets = [0, 0], sizes = [2, 32], strides = [1, 1]} : vector<2x128xf32> to vector<2x32xf32>
    %105 = arith.negf %104 : vector<2x32xf32>
    %106 = math.exp %105 : vector<2x32xf32>
    %cst_25 = arith.constant 1.000000e+00 : f32
    %107 = vector.broadcast %cst_25 : f32 to vector<2x32xf32>
    %108 = arith.addf %107, %106 : vector<2x32xf32>
    %109 = arith.divf %107, %108 : vector<2x32xf32>
    %110 = vector.extract_strided_slice %103 {offsets = [0, 32], sizes = [2, 32], strides = [1, 1]} : vector<2x128xf32> to vector<2x32xf32>
    %111 = arith.negf %110 : vector<2x32xf32>
    %112 = math.exp %111 : vector<2x32xf32>
    %cst_26 = arith.constant 1.000000e+00 : f32
    %113 = vector.broadcast %cst_26 : f32 to vector<2x32xf32>
    %114 = arith.addf %113, %112 : vector<2x32xf32>
    %115 = arith.divf %113, %114 : vector<2x32xf32>
    %116 = vector.extract_strided_slice %103 {offsets = [0, 64], sizes = [2, 32], strides = [1, 1]} : vector<2x128xf32> to vector<2x32xf32>
    %117 = math.tanh %116 : vector<2x32xf32>
    %118 = vector.extract_strided_slice %103 {offsets = [0, 96], sizes = [2, 32], strides = [1, 1]} : vector<2x128xf32> to vector<2x32xf32>
    %119 = arith.negf %118 : vector<2x32xf32>
    %120 = math.exp %119 : vector<2x32xf32>
    %cst_27 = arith.constant 1.000000e+00 : f32
    %121 = vector.broadcast %cst_27 : f32 to vector<2x32xf32>
    %122 = arith.addf %121, %120 : vector<2x32xf32>
    %123 = arith.divf %121, %122 : vector<2x32xf32>
    %124 = arith.mulf %115, %68 : vector<2x32xf32>
    %125 = arith.mulf %109, %117 : vector<2x32xf32>
    %126 = arith.addf %124, %125 : vector<2x32xf32>
    %127 = math.tanh %126 : vector<2x32xf32>
    %128 = arith.mulf %123, %127 : vector<2x32xf32>
    %129 = tpu.concatenate %102, %128 in 1 : vector<2x32xf32>, vector<2x32xf32> -> vector<2x64xf32>
    %130 = vector.extract_strided_slice %5 {offsets = [4, 0], sizes = [2, 128], strides = [1, 1]} : vector<16x128xf32> to vector<2x128xf32>
    %131 = vector.extract_strided_slice %10 {offsets = [10, 0], sizes = [2, 128], strides = [1, 1]} : vector<16x128xf32> to vector<2x128xf32>
    %132 = tpu.concatenate %130, %131 in 1 : vector<2x128xf32>, vector<2x128xf32> -> vector<2x256xf32>
    %cst_28 = arith.constant dense<0.000000e+00> : vector<2x256xf32>
    %133 = tpu.matmul %129, %11, %cst_28 {dimension_numbers = #tpu.dot_dimension_numbers<[1], [0], [0], [1], [0, 0, 1, 1], [], []>} : vector<2x64xf32>, vector<64x256xf32>, vector<2x256xf32> -> vector<2x256xf32>
    %134 = arith.addf %132, %133 : vector<2x256xf32>
    %135 = vector.extract_strided_slice %134 {offsets = [0, 0], sizes = [2, 128], strides = [1, 1]} : vector<2x256xf32> to vector<2x128xf32>
    %136 = vector.extract_strided_slice %135 {offsets = [0, 0], sizes = [2, 32], strides = [1, 1]} : vector<2x128xf32> to vector<2x32xf32>
    %137 = arith.negf %136 : vector<2x32xf32>
    %138 = math.exp %137 : vector<2x32xf32>
    %cst_29 = arith.constant 1.000000e+00 : f32
    %139 = vector.broadcast %cst_29 : f32 to vector<2x32xf32>
    %140 = arith.addf %139, %138 : vector<2x32xf32>
    %141 = arith.divf %139, %140 : vector<2x32xf32>
    %142 = vector.extract_strided_slice %135 {offsets = [0, 32], sizes = [2, 32], strides = [1, 1]} : vector<2x128xf32> to vector<2x32xf32>
    %143 = arith.negf %142 : vector<2x32xf32>
    %144 = math.exp %143 : vector<2x32xf32>
    %cst_30 = arith.constant 1.000000e+00 : f32
    %145 = vector.broadcast %cst_30 : f32 to vector<2x32xf32>
    %146 = arith.addf %145, %144 : vector<2x32xf32>
    %147 = arith.divf %145, %146 : vector<2x32xf32>
    %148 = vector.extract_strided_slice %135 {offsets = [0, 64], sizes = [2, 32], strides = [1, 1]} : vector<2x128xf32> to vector<2x32xf32>
    %149 = math.tanh %148 : vector<2x32xf32>
    %150 = vector.extract_strided_slice %135 {offsets = [0, 96], sizes = [2, 32], strides = [1, 1]} : vector<2x128xf32> to vector<2x32xf32>
    %151 = arith.negf %150 : vector<2x32xf32>
    %152 = math.exp %151 : vector<2x32xf32>
    %cst_31 = arith.constant 1.000000e+00 : f32
    %153 = vector.broadcast %cst_31 : f32 to vector<2x32xf32>
    %154 = arith.addf %153, %152 : vector<2x32xf32>
    %155 = arith.divf %153, %154 : vector<2x32xf32>
    %156 = arith.mulf %147, %100 : vector<2x32xf32>
    %157 = arith.mulf %141, %149 : vector<2x32xf32>
    %158 = arith.addf %156, %157 : vector<2x32xf32>
    %159 = math.tanh %158 : vector<2x32xf32>
    %160 = arith.mulf %155, %159 : vector<2x32xf32>
    %161 = vector.extract_strided_slice %134 {offsets = [0, 128], sizes = [2, 128], strides = [1, 1]} : vector<2x256xf32> to vector<2x128xf32>
    %162 = vector.extract_strided_slice %161 {offsets = [0, 0], sizes = [2, 32], strides = [1, 1]} : vector<2x128xf32> to vector<2x32xf32>
    %163 = arith.negf %162 : vector<2x32xf32>
    %164 = math.exp %163 : vector<2x32xf32>
    %cst_32 = arith.constant 1.000000e+00 : f32
    %165 = vector.broadcast %cst_32 : f32 to vector<2x32xf32>
    %166 = arith.addf %165, %164 : vector<2x32xf32>
    %167 = arith.divf %165, %166 : vector<2x32xf32>
    %168 = vector.extract_strided_slice %161 {offsets = [0, 32], sizes = [2, 32], strides = [1, 1]} : vector<2x128xf32> to vector<2x32xf32>
    %169 = arith.negf %168 : vector<2x32xf32>
    %170 = math.exp %169 : vector<2x32xf32>
    %cst_33 = arith.constant 1.000000e+00 : f32
    %171 = vector.broadcast %cst_33 : f32 to vector<2x32xf32>
    %172 = arith.addf %171, %170 : vector<2x32xf32>
    %173 = arith.divf %171, %172 : vector<2x32xf32>
    %174 = vector.extract_strided_slice %161 {offsets = [0, 64], sizes = [2, 32], strides = [1, 1]} : vector<2x128xf32> to vector<2x32xf32>
    %175 = math.tanh %174 : vector<2x32xf32>
    %176 = vector.extract_strided_slice %161 {offsets = [0, 96], sizes = [2, 32], strides = [1, 1]} : vector<2x128xf32> to vector<2x32xf32>
    %177 = arith.negf %176 : vector<2x32xf32>
    %178 = math.exp %177 : vector<2x32xf32>
    %cst_34 = arith.constant 1.000000e+00 : f32
    %179 = vector.broadcast %cst_34 : f32 to vector<2x32xf32>
    %180 = arith.addf %179, %178 : vector<2x32xf32>
    %181 = arith.divf %179, %180 : vector<2x32xf32>
    %182 = arith.mulf %173, %126 : vector<2x32xf32>
    %183 = arith.mulf %167, %175 : vector<2x32xf32>
    %184 = arith.addf %182, %183 : vector<2x32xf32>
    %185 = math.tanh %184 : vector<2x32xf32>
    %186 = arith.mulf %181, %185 : vector<2x32xf32>
    %187 = tpu.concatenate %160, %186 in 1 : vector<2x32xf32>, vector<2x32xf32> -> vector<2x64xf32>
    %188 = vector.extract_strided_slice %5 {offsets = [6, 0], sizes = [2, 128], strides = [1, 1]} : vector<16x128xf32> to vector<2x128xf32>
    %189 = vector.extract_strided_slice %10 {offsets = [8, 0], sizes = [2, 128], strides = [1, 1]} : vector<16x128xf32> to vector<2x128xf32>
    %190 = tpu.concatenate %188, %189 in 1 : vector<2x128xf32>, vector<2x128xf32> -> vector<2x256xf32>
    %cst_35 = arith.constant dense<0.000000e+00> : vector<2x256xf32>
    %191 = tpu.matmul %187, %11, %cst_35 {dimension_numbers = #tpu.dot_dimension_numbers<[1], [0], [0], [1], [0, 0, 1, 1], [], []>} : vector<2x64xf32>, vector<64x256xf32>, vector<2x256xf32> -> vector<2x256xf32>
    %192 = arith.addf %190, %191 : vector<2x256xf32>
    %193 = vector.extract_strided_slice %192 {offsets = [0, 0], sizes = [2, 128], strides = [1, 1]} : vector<2x256xf32> to vector<2x128xf32>
    %194 = vector.extract_strided_slice %193 {offsets = [0, 0], sizes = [2, 32], strides = [1, 1]} : vector<2x128xf32> to vector<2x32xf32>
    %195 = arith.negf %194 : vector<2x32xf32>
    %196 = math.exp %195 : vector<2x32xf32>
    %cst_36 = arith.constant 1.000000e+00 : f32
    %197 = vector.broadcast %cst_36 : f32 to vector<2x32xf32>
    %198 = arith.addf %197, %196 : vector<2x32xf32>
    %199 = arith.divf %197, %198 : vector<2x32xf32>
    %200 = vector.extract_strided_slice %193 {offsets = [0, 32], sizes = [2, 32], strides = [1, 1]} : vector<2x128xf32> to vector<2x32xf32>
    %201 = arith.negf %200 : vector<2x32xf32>
    %202 = math.exp %201 : vector<2x32xf32>
    %cst_37 = arith.constant 1.000000e+00 : f32
    %203 = vector.broadcast %cst_37 : f32 to vector<2x32xf32>
    %204 = arith.addf %203, %202 : vector<2x32xf32>
    %205 = arith.divf %203, %204 : vector<2x32xf32>
    %206 = vector.extract_strided_slice %193 {offsets = [0, 64], sizes = [2, 32], strides = [1, 1]} : vector<2x128xf32> to vector<2x32xf32>
    %207 = math.tanh %206 : vector<2x32xf32>
    %208 = vector.extract_strided_slice %193 {offsets = [0, 96], sizes = [2, 32], strides = [1, 1]} : vector<2x128xf32> to vector<2x32xf32>
    %209 = arith.negf %208 : vector<2x32xf32>
    %210 = math.exp %209 : vector<2x32xf32>
    %cst_38 = arith.constant 1.000000e+00 : f32
    %211 = vector.broadcast %cst_38 : f32 to vector<2x32xf32>
    %212 = arith.addf %211, %210 : vector<2x32xf32>
    %213 = arith.divf %211, %212 : vector<2x32xf32>
    %214 = arith.mulf %205, %158 : vector<2x32xf32>
    %215 = arith.mulf %199, %207 : vector<2x32xf32>
    %216 = arith.addf %214, %215 : vector<2x32xf32>
    %217 = math.tanh %216 : vector<2x32xf32>
    %218 = arith.mulf %213, %217 : vector<2x32xf32>
    %219 = vector.extract_strided_slice %192 {offsets = [0, 128], sizes = [2, 128], strides = [1, 1]} : vector<2x256xf32> to vector<2x128xf32>
    %220 = vector.extract_strided_slice %219 {offsets = [0, 0], sizes = [2, 32], strides = [1, 1]} : vector<2x128xf32> to vector<2x32xf32>
    %221 = arith.negf %220 : vector<2x32xf32>
    %222 = math.exp %221 : vector<2x32xf32>
    %cst_39 = arith.constant 1.000000e+00 : f32
    %223 = vector.broadcast %cst_39 : f32 to vector<2x32xf32>
    %224 = arith.addf %223, %222 : vector<2x32xf32>
    %225 = arith.divf %223, %224 : vector<2x32xf32>
    %226 = vector.extract_strided_slice %219 {offsets = [0, 32], sizes = [2, 32], strides = [1, 1]} : vector<2x128xf32> to vector<2x32xf32>
    %227 = arith.negf %226 : vector<2x32xf32>
    %228 = math.exp %227 : vector<2x32xf32>
    %cst_40 = arith.constant 1.000000e+00 : f32
    %229 = vector.broadcast %cst_40 : f32 to vector<2x32xf32>
    %230 = arith.addf %229, %228 : vector<2x32xf32>
    %231 = arith.divf %229, %230 : vector<2x32xf32>
    %232 = vector.extract_strided_slice %219 {offsets = [0, 64], sizes = [2, 32], strides = [1, 1]} : vector<2x128xf32> to vector<2x32xf32>
    %233 = math.tanh %232 : vector<2x32xf32>
    %234 = vector.extract_strided_slice %219 {offsets = [0, 96], sizes = [2, 32], strides = [1, 1]} : vector<2x128xf32> to vector<2x32xf32>
    %235 = arith.negf %234 : vector<2x32xf32>
    %236 = math.exp %235 : vector<2x32xf32>
    %cst_41 = arith.constant 1.000000e+00 : f32
    %237 = vector.broadcast %cst_41 : f32 to vector<2x32xf32>
    %238 = arith.addf %237, %236 : vector<2x32xf32>
    %239 = arith.divf %237, %238 : vector<2x32xf32>
    %240 = arith.mulf %231, %184 : vector<2x32xf32>
    %241 = arith.mulf %225, %233 : vector<2x32xf32>
    %242 = arith.addf %240, %241 : vector<2x32xf32>
    %243 = math.tanh %242 : vector<2x32xf32>
    %244 = arith.mulf %239, %243 : vector<2x32xf32>
    %245 = tpu.concatenate %218, %244 in 1 : vector<2x32xf32>, vector<2x32xf32> -> vector<2x64xf32>
    %246 = vector.extract_strided_slice %5 {offsets = [8, 0], sizes = [2, 128], strides = [1, 1]} : vector<16x128xf32> to vector<2x128xf32>
    %247 = vector.extract_strided_slice %10 {offsets = [6, 0], sizes = [2, 128], strides = [1, 1]} : vector<16x128xf32> to vector<2x128xf32>
    %248 = tpu.concatenate %246, %247 in 1 : vector<2x128xf32>, vector<2x128xf32> -> vector<2x256xf32>
    %cst_42 = arith.constant dense<0.000000e+00> : vector<2x256xf32>
    %249 = tpu.matmul %245, %11, %cst_42 {dimension_numbers = #tpu.dot_dimension_numbers<[1], [0], [0], [1], [0, 0, 1, 1], [], []>} : vector<2x64xf32>, vector<64x256xf32>, vector<2x256xf32> -> vector<2x256xf32>
    %250 = arith.addf %248, %249 : vector<2x256xf32>
    %251 = vector.extract_strided_slice %250 {offsets = [0, 0], sizes = [2, 128], strides = [1, 1]} : vector<2x256xf32> to vector<2x128xf32>
    %252 = vector.extract_strided_slice %251 {offsets = [0, 0], sizes = [2, 32], strides = [1, 1]} : vector<2x128xf32> to vector<2x32xf32>
    %253 = arith.negf %252 : vector<2x32xf32>
    %254 = math.exp %253 : vector<2x32xf32>
    %cst_43 = arith.constant 1.000000e+00 : f32
    %255 = vector.broadcast %cst_43 : f32 to vector<2x32xf32>
    %256 = arith.addf %255, %254 : vector<2x32xf32>
    %257 = arith.divf %255, %256 : vector<2x32xf32>
    %258 = vector.extract_strided_slice %251 {offsets = [0, 32], sizes = [2, 32], strides = [1, 1]} : vector<2x128xf32> to vector<2x32xf32>
    %259 = arith.negf %258 : vector<2x32xf32>
    %260 = math.exp %259 : vector<2x32xf32>
    %cst_44 = arith.constant 1.000000e+00 : f32
    %261 = vector.broadcast %cst_44 : f32 to vector<2x32xf32>
    %262 = arith.addf %261, %260 : vector<2x32xf32>
    %263 = arith.divf %261, %262 : vector<2x32xf32>
    %264 = vector.extract_strided_slice %251 {offsets = [0, 64], sizes = [2, 32], strides = [1, 1]} : vector<2x128xf32> to vector<2x32xf32>
    %265 = math.tanh %264 : vector<2x32xf32>
    %266 = vector.extract_strided_slice %251 {offsets = [0, 96], sizes = [2, 32], strides = [1, 1]} : vector<2x128xf32> to vector<2x32xf32>
    %267 = arith.negf %266 : vector<2x32xf32>
    %268 = math.exp %267 : vector<2x32xf32>
    %cst_45 = arith.constant 1.000000e+00 : f32
    %269 = vector.broadcast %cst_45 : f32 to vector<2x32xf32>
    %270 = arith.addf %269, %268 : vector<2x32xf32>
    %271 = arith.divf %269, %270 : vector<2x32xf32>
    %272 = arith.mulf %263, %216 : vector<2x32xf32>
    %273 = arith.mulf %257, %265 : vector<2x32xf32>
    %274 = arith.addf %272, %273 : vector<2x32xf32>
    %275 = math.tanh %274 : vector<2x32xf32>
    %276 = arith.mulf %271, %275 : vector<2x32xf32>
    %277 = vector.extract_strided_slice %250 {offsets = [0, 128], sizes = [2, 128], strides = [1, 1]} : vector<2x256xf32> to vector<2x128xf32>
    %278 = vector.extract_strided_slice %277 {offsets = [0, 0], sizes = [2, 32], strides = [1, 1]} : vector<2x128xf32> to vector<2x32xf32>
    %279 = arith.negf %278 : vector<2x32xf32>
    %280 = math.exp %279 : vector<2x32xf32>
    %cst_46 = arith.constant 1.000000e+00 : f32
    %281 = vector.broadcast %cst_46 : f32 to vector<2x32xf32>
    %282 = arith.addf %281, %280 : vector<2x32xf32>
    %283 = arith.divf %281, %282 : vector<2x32xf32>
    %284 = vector.extract_strided_slice %277 {offsets = [0, 32], sizes = [2, 32], strides = [1, 1]} : vector<2x128xf32> to vector<2x32xf32>
    %285 = arith.negf %284 : vector<2x32xf32>
    %286 = math.exp %285 : vector<2x32xf32>
    %cst_47 = arith.constant 1.000000e+00 : f32
    %287 = vector.broadcast %cst_47 : f32 to vector<2x32xf32>
    %288 = arith.addf %287, %286 : vector<2x32xf32>
    %289 = arith.divf %287, %288 : vector<2x32xf32>
    %290 = vector.extract_strided_slice %277 {offsets = [0, 64], sizes = [2, 32], strides = [1, 1]} : vector<2x128xf32> to vector<2x32xf32>
    %291 = math.tanh %290 : vector<2x32xf32>
    %292 = vector.extract_strided_slice %277 {offsets = [0, 96], sizes = [2, 32], strides = [1, 1]} : vector<2x128xf32> to vector<2x32xf32>
    %293 = arith.negf %292 : vector<2x32xf32>
    %294 = math.exp %293 : vector<2x32xf32>
    %cst_48 = arith.constant 1.000000e+00 : f32
    %295 = vector.broadcast %cst_48 : f32 to vector<2x32xf32>
    %296 = arith.addf %295, %294 : vector<2x32xf32>
    %297 = arith.divf %295, %296 : vector<2x32xf32>
    %298 = arith.mulf %289, %242 : vector<2x32xf32>
    %299 = arith.mulf %283, %291 : vector<2x32xf32>
    %300 = arith.addf %298, %299 : vector<2x32xf32>
    %301 = math.tanh %300 : vector<2x32xf32>
    %302 = arith.mulf %297, %301 : vector<2x32xf32>
    %303 = tpu.concatenate %276, %302 in 1 : vector<2x32xf32>, vector<2x32xf32> -> vector<2x64xf32>
    %304 = vector.extract_strided_slice %5 {offsets = [10, 0], sizes = [2, 128], strides = [1, 1]} : vector<16x128xf32> to vector<2x128xf32>
    %305 = vector.extract_strided_slice %10 {offsets = [4, 0], sizes = [2, 128], strides = [1, 1]} : vector<16x128xf32> to vector<2x128xf32>
    %306 = tpu.concatenate %304, %305 in 1 : vector<2x128xf32>, vector<2x128xf32> -> vector<2x256xf32>
    %cst_49 = arith.constant dense<0.000000e+00> : vector<2x256xf32>
    %307 = tpu.matmul %303, %11, %cst_49 {dimension_numbers = #tpu.dot_dimension_numbers<[1], [0], [0], [1], [0, 0, 1, 1], [], []>} : vector<2x64xf32>, vector<64x256xf32>, vector<2x256xf32> -> vector<2x256xf32>
    %308 = arith.addf %306, %307 : vector<2x256xf32>
    %309 = vector.extract_strided_slice %308 {offsets = [0, 0], sizes = [2, 128], strides = [1, 1]} : vector<2x256xf32> to vector<2x128xf32>
    %310 = vector.extract_strided_slice %309 {offsets = [0, 0], sizes = [2, 32], strides = [1, 1]} : vector<2x128xf32> to vector<2x32xf32>
    %311 = arith.negf %310 : vector<2x32xf32>
    %312 = math.exp %311 : vector<2x32xf32>
    %cst_50 = arith.constant 1.000000e+00 : f32
    %313 = vector.broadcast %cst_50 : f32 to vector<2x32xf32>
    %314 = arith.addf %313, %312 : vector<2x32xf32>
    %315 = arith.divf %313, %314 : vector<2x32xf32>
    %316 = vector.extract_strided_slice %309 {offsets = [0, 32], sizes = [2, 32], strides = [1, 1]} : vector<2x128xf32> to vector<2x32xf32>
    %317 = arith.negf %316 : vector<2x32xf32>
    %318 = math.exp %317 : vector<2x32xf32>
    %cst_51 = arith.constant 1.000000e+00 : f32
    %319 = vector.broadcast %cst_51 : f32 to vector<2x32xf32>
    %320 = arith.addf %319, %318 : vector<2x32xf32>
    %321 = arith.divf %319, %320 : vector<2x32xf32>
    %322 = vector.extract_strided_slice %309 {offsets = [0, 64], sizes = [2, 32], strides = [1, 1]} : vector<2x128xf32> to vector<2x32xf32>
    %323 = math.tanh %322 : vector<2x32xf32>
    %324 = vector.extract_strided_slice %309 {offsets = [0, 96], sizes = [2, 32], strides = [1, 1]} : vector<2x128xf32> to vector<2x32xf32>
    %325 = arith.negf %324 : vector<2x32xf32>
    %326 = math.exp %325 : vector<2x32xf32>
    %cst_52 = arith.constant 1.000000e+00 : f32
    %327 = vector.broadcast %cst_52 : f32 to vector<2x32xf32>
    %328 = arith.addf %327, %326 : vector<2x32xf32>
    %329 = arith.divf %327, %328 : vector<2x32xf32>
    %330 = arith.mulf %321, %274 : vector<2x32xf32>
    %331 = arith.mulf %315, %323 : vector<2x32xf32>
    %332 = arith.addf %330, %331 : vector<2x32xf32>
    %333 = math.tanh %332 : vector<2x32xf32>
    %334 = arith.mulf %329, %333 : vector<2x32xf32>
    %335 = vector.extract_strided_slice %308 {offsets = [0, 128], sizes = [2, 128], strides = [1, 1]} : vector<2x256xf32> to vector<2x128xf32>
    %336 = vector.extract_strided_slice %335 {offsets = [0, 0], sizes = [2, 32], strides = [1, 1]} : vector<2x128xf32> to vector<2x32xf32>
    %337 = arith.negf %336 : vector<2x32xf32>
    %338 = math.exp %337 : vector<2x32xf32>
    %cst_53 = arith.constant 1.000000e+00 : f32
    %339 = vector.broadcast %cst_53 : f32 to vector<2x32xf32>
    %340 = arith.addf %339, %338 : vector<2x32xf32>
    %341 = arith.divf %339, %340 : vector<2x32xf32>
    %342 = vector.extract_strided_slice %335 {offsets = [0, 32], sizes = [2, 32], strides = [1, 1]} : vector<2x128xf32> to vector<2x32xf32>
    %343 = arith.negf %342 : vector<2x32xf32>
    %344 = math.exp %343 : vector<2x32xf32>
    %cst_54 = arith.constant 1.000000e+00 : f32
    %345 = vector.broadcast %cst_54 : f32 to vector<2x32xf32>
    %346 = arith.addf %345, %344 : vector<2x32xf32>
    %347 = arith.divf %345, %346 : vector<2x32xf32>
    %348 = vector.extract_strided_slice %335 {offsets = [0, 64], sizes = [2, 32], strides = [1, 1]} : vector<2x128xf32> to vector<2x32xf32>
    %349 = math.tanh %348 : vector<2x32xf32>
    %350 = vector.extract_strided_slice %335 {offsets = [0, 96], sizes = [2, 32], strides = [1, 1]} : vector<2x128xf32> to vector<2x32xf32>
    %351 = arith.negf %350 : vector<2x32xf32>
    %352 = math.exp %351 : vector<2x32xf32>
    %cst_55 = arith.constant 1.000000e+00 : f32
    %353 = vector.broadcast %cst_55 : f32 to vector<2x32xf32>
    %354 = arith.addf %353, %352 : vector<2x32xf32>
    %355 = arith.divf %353, %354 : vector<2x32xf32>
    %356 = arith.mulf %347, %300 : vector<2x32xf32>
    %357 = arith.mulf %341, %349 : vector<2x32xf32>
    %358 = arith.addf %356, %357 : vector<2x32xf32>
    %359 = math.tanh %358 : vector<2x32xf32>
    %360 = arith.mulf %355, %359 : vector<2x32xf32>
    %361 = tpu.concatenate %334, %360 in 1 : vector<2x32xf32>, vector<2x32xf32> -> vector<2x64xf32>
    %362 = vector.extract_strided_slice %5 {offsets = [12, 0], sizes = [2, 128], strides = [1, 1]} : vector<16x128xf32> to vector<2x128xf32>
    %363 = vector.extract_strided_slice %10 {offsets = [2, 0], sizes = [2, 128], strides = [1, 1]} : vector<16x128xf32> to vector<2x128xf32>
    %364 = tpu.concatenate %362, %363 in 1 : vector<2x128xf32>, vector<2x128xf32> -> vector<2x256xf32>
    %cst_56 = arith.constant dense<0.000000e+00> : vector<2x256xf32>
    %365 = tpu.matmul %361, %11, %cst_56 {dimension_numbers = #tpu.dot_dimension_numbers<[1], [0], [0], [1], [0, 0, 1, 1], [], []>} : vector<2x64xf32>, vector<64x256xf32>, vector<2x256xf32> -> vector<2x256xf32>
    %366 = arith.addf %364, %365 : vector<2x256xf32>
    %367 = vector.extract_strided_slice %366 {offsets = [0, 0], sizes = [2, 128], strides = [1, 1]} : vector<2x256xf32> to vector<2x128xf32>
    %368 = vector.extract_strided_slice %367 {offsets = [0, 0], sizes = [2, 32], strides = [1, 1]} : vector<2x128xf32> to vector<2x32xf32>
    %369 = arith.negf %368 : vector<2x32xf32>
    %370 = math.exp %369 : vector<2x32xf32>
    %cst_57 = arith.constant 1.000000e+00 : f32
    %371 = vector.broadcast %cst_57 : f32 to vector<2x32xf32>
    %372 = arith.addf %371, %370 : vector<2x32xf32>
    %373 = arith.divf %371, %372 : vector<2x32xf32>
    %374 = vector.extract_strided_slice %367 {offsets = [0, 32], sizes = [2, 32], strides = [1, 1]} : vector<2x128xf32> to vector<2x32xf32>
    %375 = arith.negf %374 : vector<2x32xf32>
    %376 = math.exp %375 : vector<2x32xf32>
    %cst_58 = arith.constant 1.000000e+00 : f32
    %377 = vector.broadcast %cst_58 : f32 to vector<2x32xf32>
    %378 = arith.addf %377, %376 : vector<2x32xf32>
    %379 = arith.divf %377, %378 : vector<2x32xf32>
    %380 = vector.extract_strided_slice %367 {offsets = [0, 64], sizes = [2, 32], strides = [1, 1]} : vector<2x128xf32> to vector<2x32xf32>
    %381 = math.tanh %380 : vector<2x32xf32>
    %382 = vector.extract_strided_slice %367 {offsets = [0, 96], sizes = [2, 32], strides = [1, 1]} : vector<2x128xf32> to vector<2x32xf32>
    %383 = arith.negf %382 : vector<2x32xf32>
    %384 = math.exp %383 : vector<2x32xf32>
    %cst_59 = arith.constant 1.000000e+00 : f32
    %385 = vector.broadcast %cst_59 : f32 to vector<2x32xf32>
    %386 = arith.addf %385, %384 : vector<2x32xf32>
    %387 = arith.divf %385, %386 : vector<2x32xf32>
    %388 = arith.mulf %379, %332 : vector<2x32xf32>
    %389 = arith.mulf %373, %381 : vector<2x32xf32>
    %390 = arith.addf %388, %389 : vector<2x32xf32>
    %391 = math.tanh %390 : vector<2x32xf32>
    %392 = arith.mulf %387, %391 : vector<2x32xf32>
    %393 = vector.extract_strided_slice %366 {offsets = [0, 128], sizes = [2, 128], strides = [1, 1]} : vector<2x256xf32> to vector<2x128xf32>
    %394 = vector.extract_strided_slice %393 {offsets = [0, 0], sizes = [2, 32], strides = [1, 1]} : vector<2x128xf32> to vector<2x32xf32>
    %395 = arith.negf %394 : vector<2x32xf32>
    %396 = math.exp %395 : vector<2x32xf32>
    %cst_60 = arith.constant 1.000000e+00 : f32
    %397 = vector.broadcast %cst_60 : f32 to vector<2x32xf32>
    %398 = arith.addf %397, %396 : vector<2x32xf32>
    %399 = arith.divf %397, %398 : vector<2x32xf32>
    %400 = vector.extract_strided_slice %393 {offsets = [0, 32], sizes = [2, 32], strides = [1, 1]} : vector<2x128xf32> to vector<2x32xf32>
    %401 = arith.negf %400 : vector<2x32xf32>
    %402 = math.exp %401 : vector<2x32xf32>
    %cst_61 = arith.constant 1.000000e+00 : f32
    %403 = vector.broadcast %cst_61 : f32 to vector<2x32xf32>
    %404 = arith.addf %403, %402 : vector<2x32xf32>
    %405 = arith.divf %403, %404 : vector<2x32xf32>
    %406 = vector.extract_strided_slice %393 {offsets = [0, 64], sizes = [2, 32], strides = [1, 1]} : vector<2x128xf32> to vector<2x32xf32>
    %407 = math.tanh %406 : vector<2x32xf32>
    %408 = vector.extract_strided_slice %393 {offsets = [0, 96], sizes = [2, 32], strides = [1, 1]} : vector<2x128xf32> to vector<2x32xf32>
    %409 = arith.negf %408 : vector<2x32xf32>
    %410 = math.exp %409 : vector<2x32xf32>
    %cst_62 = arith.constant 1.000000e+00 : f32
    %411 = vector.broadcast %cst_62 : f32 to vector<2x32xf32>
    %412 = arith.addf %411, %410 : vector<2x32xf32>
    %413 = arith.divf %411, %412 : vector<2x32xf32>
    %414 = arith.mulf %405, %358 : vector<2x32xf32>
    %415 = arith.mulf %399, %407 : vector<2x32xf32>
    %416 = arith.addf %414, %415 : vector<2x32xf32>
    %417 = math.tanh %416 : vector<2x32xf32>
    %418 = arith.mulf %413, %417 : vector<2x32xf32>
    %419 = tpu.concatenate %392, %418 in 1 : vector<2x32xf32>, vector<2x32xf32> -> vector<2x64xf32>
    %420 = vector.extract_strided_slice %5 {offsets = [14, 0], sizes = [2, 128], strides = [1, 1]} : vector<16x128xf32> to vector<2x128xf32>
    %421 = vector.extract_strided_slice %10 {offsets = [0, 0], sizes = [2, 128], strides = [1, 1]} : vector<16x128xf32> to vector<2x128xf32>
    %422 = tpu.concatenate %420, %421 in 1 : vector<2x128xf32>, vector<2x128xf32> -> vector<2x256xf32>
    %cst_63 = arith.constant dense<0.000000e+00> : vector<2x256xf32>
    %423 = tpu.matmul %419, %11, %cst_63 {dimension_numbers = #tpu.dot_dimension_numbers<[1], [0], [0], [1], [0, 0, 1, 1], [], []>} : vector<2x64xf32>, vector<64x256xf32>, vector<2x256xf32> -> vector<2x256xf32>
    %424 = arith.addf %422, %423 : vector<2x256xf32>
    %425 = vector.extract_strided_slice %424 {offsets = [0, 0], sizes = [2, 128], strides = [1, 1]} : vector<2x256xf32> to vector<2x128xf32>
    %426 = vector.extract_strided_slice %425 {offsets = [0, 0], sizes = [2, 32], strides = [1, 1]} : vector<2x128xf32> to vector<2x32xf32>
    %427 = arith.negf %426 : vector<2x32xf32>
    %428 = math.exp %427 : vector<2x32xf32>
    %cst_64 = arith.constant 1.000000e+00 : f32
    %429 = vector.broadcast %cst_64 : f32 to vector<2x32xf32>
    %430 = arith.addf %429, %428 : vector<2x32xf32>
    %431 = arith.divf %429, %430 : vector<2x32xf32>
    %432 = vector.extract_strided_slice %425 {offsets = [0, 32], sizes = [2, 32], strides = [1, 1]} : vector<2x128xf32> to vector<2x32xf32>
    %433 = arith.negf %432 : vector<2x32xf32>
    %434 = math.exp %433 : vector<2x32xf32>
    %cst_65 = arith.constant 1.000000e+00 : f32
    %435 = vector.broadcast %cst_65 : f32 to vector<2x32xf32>
    %436 = arith.addf %435, %434 : vector<2x32xf32>
    %437 = arith.divf %435, %436 : vector<2x32xf32>
    %438 = vector.extract_strided_slice %425 {offsets = [0, 64], sizes = [2, 32], strides = [1, 1]} : vector<2x128xf32> to vector<2x32xf32>
    %439 = math.tanh %438 : vector<2x32xf32>
    %440 = vector.extract_strided_slice %425 {offsets = [0, 96], sizes = [2, 32], strides = [1, 1]} : vector<2x128xf32> to vector<2x32xf32>
    %441 = arith.negf %440 : vector<2x32xf32>
    %442 = math.exp %441 : vector<2x32xf32>
    %cst_66 = arith.constant 1.000000e+00 : f32
    %443 = vector.broadcast %cst_66 : f32 to vector<2x32xf32>
    %444 = arith.addf %443, %442 : vector<2x32xf32>
    %445 = arith.divf %443, %444 : vector<2x32xf32>
    %446 = arith.mulf %437, %390 : vector<2x32xf32>
    %447 = arith.mulf %431, %439 : vector<2x32xf32>
    %448 = arith.addf %446, %447 : vector<2x32xf32>
    %449 = math.tanh %448 : vector<2x32xf32>
    %450 = arith.mulf %445, %449 : vector<2x32xf32>
    %451 = vector.extract_strided_slice %424 {offsets = [0, 128], sizes = [2, 128], strides = [1, 1]} : vector<2x256xf32> to vector<2x128xf32>
    %452 = vector.extract_strided_slice %451 {offsets = [0, 0], sizes = [2, 32], strides = [1, 1]} : vector<2x128xf32> to vector<2x32xf32>
    %453 = arith.negf %452 : vector<2x32xf32>
    %454 = math.exp %453 : vector<2x32xf32>
    %cst_67 = arith.constant 1.000000e+00 : f32
    %455 = vector.broadcast %cst_67 : f32 to vector<2x32xf32>
    %456 = arith.addf %455, %454 : vector<2x32xf32>
    %457 = arith.divf %455, %456 : vector<2x32xf32>
    %458 = vector.extract_strided_slice %451 {offsets = [0, 32], sizes = [2, 32], strides = [1, 1]} : vector<2x128xf32> to vector<2x32xf32>
    %459 = arith.negf %458 : vector<2x32xf32>
    %460 = math.exp %459 : vector<2x32xf32>
    %cst_68 = arith.constant 1.000000e+00 : f32
    %461 = vector.broadcast %cst_68 : f32 to vector<2x32xf32>
    %462 = arith.addf %461, %460 : vector<2x32xf32>
    %463 = arith.divf %461, %462 : vector<2x32xf32>
    %464 = vector.extract_strided_slice %451 {offsets = [0, 64], sizes = [2, 32], strides = [1, 1]} : vector<2x128xf32> to vector<2x32xf32>
    %465 = math.tanh %464 : vector<2x32xf32>
    %466 = vector.extract_strided_slice %451 {offsets = [0, 96], sizes = [2, 32], strides = [1, 1]} : vector<2x128xf32> to vector<2x32xf32>
    %467 = arith.negf %466 : vector<2x32xf32>
    %468 = math.exp %467 : vector<2x32xf32>
    %cst_69 = arith.constant 1.000000e+00 : f32
    %469 = vector.broadcast %cst_69 : f32 to vector<2x32xf32>
    %470 = arith.addf %469, %468 : vector<2x32xf32>
    %471 = arith.divf %469, %470 : vector<2x32xf32>
    %472 = arith.mulf %463, %416 : vector<2x32xf32>
    %473 = arith.mulf %457, %465 : vector<2x32xf32>
    %474 = arith.addf %472, %473 : vector<2x32xf32>
    %475 = math.tanh %474 : vector<2x32xf32>
    %476 = arith.mulf %471, %475 : vector<2x32xf32>
    %477 = tpu.concatenate %44, %476 in 1 : vector<2x32xf32>, vector<2x32xf32> -> vector<2x64xf32>
    %478 = tpu.concatenate %102, %418 in 1 : vector<2x32xf32>, vector<2x32xf32> -> vector<2x64xf32>
    %479 = tpu.concatenate %160, %360 in 1 : vector<2x32xf32>, vector<2x32xf32> -> vector<2x64xf32>
    %480 = tpu.concatenate %218, %302 in 1 : vector<2x32xf32>, vector<2x32xf32> -> vector<2x64xf32>
    %481 = tpu.concatenate %276, %244 in 1 : vector<2x32xf32>, vector<2x32xf32> -> vector<2x64xf32>
    %482 = tpu.concatenate %334, %186 in 1 : vector<2x32xf32>, vector<2x32xf32> -> vector<2x64xf32>
    %483 = tpu.concatenate %392, %128 in 1 : vector<2x32xf32>, vector<2x32xf32> -> vector<2x64xf32>
    %484 = tpu.concatenate %450, %70 in 1 : vector<2x32xf32>, vector<2x32xf32> -> vector<2x64xf32>
    %485 = tpu.concatenate %477, %478, %479, %480, %481, %482, %483, %484 in 0 : vector<2x64xf32>, vector<2x64xf32>, vector<2x64xf32>, vector<2x64xf32>, vector<2x64xf32>, vector<2x64xf32>, vector<2x64xf32>, vector<2x64xf32> -> vector<16x64xf32>
    %c0_70 = arith.constant 0 : index
    %c0_71 = arith.constant 0 : index
    %486 = vector.load %arg6[%c0_70, %c0_71] : memref<64x128xf32, #tpu.memory_space<vmem>>, vector<64x128xf32>
    %cst_72 = arith.constant dense<0.000000e+00> : vector<16x128xf32>
    %487 = tpu.matmul %485, %486, %cst_72 {dimension_numbers = #tpu.dot_dimension_numbers<[1], [0], [0], [1], [0, 0, 1, 1], [], []>} : vector<16x64xf32>, vector<64x128xf32>, vector<16x128xf32> -> vector<16x128xf32>
    %c0_73 = arith.constant 0 : index
    %c0_74 = arith.constant 0 : index
    %488 = vector.load %arg8[%c0_73, %c0_74] : memref<1x128xf32, #tpu.memory_space<vmem>>, vector<1x128xf32>
    %489 = vector.broadcast %488 : vector<1x128xf32> to vector<16x128xf32>
    %490 = arith.addf %487, %489 : vector<16x128xf32>
    %c0_75 = arith.constant 0 : index
    %c0_76 = arith.constant 0 : index
    %491 = vector.load %arg7[%c0_75, %c0_76] : memref<32x128xf32, #tpu.memory_space<vmem>>, vector<32x128xf32>
    %cst_77 = arith.constant 0.000000e+00 : f32
    %492 = vector.broadcast %cst_77 : f32 to vector<2x32xf32>
    %493 = vector.extract_strided_slice %490 {offsets = [0, 0], sizes = [2, 128], strides = [1, 1]} : vector<16x128xf32> to vector<2x128xf32>
    %cst_78 = arith.constant dense<0.000000e+00> : vector<2x128xf32>
    %494 = tpu.matmul %492, %491, %cst_78 {dimension_numbers = #tpu.dot_dimension_numbers<[1], [0], [0], [1], [0, 0, 1, 1], [], []>} : vector<2x32xf32>, vector<32x128xf32>, vector<2x128xf32> -> vector<2x128xf32>
    %495 = arith.addf %493, %494 : vector<2x128xf32>
    %496 = vector.extract_strided_slice %495 {offsets = [0, 0], sizes = [2, 32], strides = [1, 1]} : vector<2x128xf32> to vector<2x32xf32>
    %497 = arith.negf %496 : vector<2x32xf32>
    %498 = math.exp %497 : vector<2x32xf32>
    %cst_79 = arith.constant 1.000000e+00 : f32
    %499 = vector.broadcast %cst_79 : f32 to vector<2x32xf32>
    %500 = arith.addf %499, %498 : vector<2x32xf32>
    %501 = arith.divf %499, %500 : vector<2x32xf32>
    %502 = vector.extract_strided_slice %495 {offsets = [0, 32], sizes = [2, 32], strides = [1, 1]} : vector<2x128xf32> to vector<2x32xf32>
    %503 = arith.negf %502 : vector<2x32xf32>
    %504 = math.exp %503 : vector<2x32xf32>
    %cst_80 = arith.constant 1.000000e+00 : f32
    %505 = vector.broadcast %cst_80 : f32 to vector<2x32xf32>
    %506 = arith.addf %505, %504 : vector<2x32xf32>
    %507 = arith.divf %505, %506 : vector<2x32xf32>
    %508 = vector.extract_strided_slice %495 {offsets = [0, 64], sizes = [2, 32], strides = [1, 1]} : vector<2x128xf32> to vector<2x32xf32>
    %509 = math.tanh %508 : vector<2x32xf32>
    %510 = vector.extract_strided_slice %495 {offsets = [0, 96], sizes = [2, 32], strides = [1, 1]} : vector<2x128xf32> to vector<2x32xf32>
    %511 = arith.negf %510 : vector<2x32xf32>
    %512 = math.exp %511 : vector<2x32xf32>
    %cst_81 = arith.constant 1.000000e+00 : f32
    %513 = vector.broadcast %cst_81 : f32 to vector<2x32xf32>
    %514 = arith.addf %513, %512 : vector<2x32xf32>
    %515 = arith.divf %513, %514 : vector<2x32xf32>
    %516 = arith.mulf %507, %492 : vector<2x32xf32>
    %517 = arith.mulf %501, %509 : vector<2x32xf32>
    %518 = arith.addf %516, %517 : vector<2x32xf32>
    %519 = math.tanh %518 : vector<2x32xf32>
    %520 = arith.mulf %515, %519 : vector<2x32xf32>
    %521 = vector.extract_strided_slice %490 {offsets = [2, 0], sizes = [2, 128], strides = [1, 1]} : vector<16x128xf32> to vector<2x128xf32>
    %cst_82 = arith.constant dense<0.000000e+00> : vector<2x128xf32>
    %522 = tpu.matmul %520, %491, %cst_82 {dimension_numbers = #tpu.dot_dimension_numbers<[1], [0], [0], [1], [0, 0, 1, 1], [], []>} : vector<2x32xf32>, vector<32x128xf32>, vector<2x128xf32> -> vector<2x128xf32>
    %523 = arith.addf %521, %522 : vector<2x128xf32>
    %524 = vector.extract_strided_slice %523 {offsets = [0, 0], sizes = [2, 32], strides = [1, 1]} : vector<2x128xf32> to vector<2x32xf32>
    %525 = arith.negf %524 : vector<2x32xf32>
    %526 = math.exp %525 : vector<2x32xf32>
    %cst_83 = arith.constant 1.000000e+00 : f32
    %527 = vector.broadcast %cst_83 : f32 to vector<2x32xf32>
    %528 = arith.addf %527, %526 : vector<2x32xf32>
    %529 = arith.divf %527, %528 : vector<2x32xf32>
    %530 = vector.extract_strided_slice %523 {offsets = [0, 32], sizes = [2, 32], strides = [1, 1]} : vector<2x128xf32> to vector<2x32xf32>
    %531 = arith.negf %530 : vector<2x32xf32>
    %532 = math.exp %531 : vector<2x32xf32>
    %cst_84 = arith.constant 1.000000e+00 : f32
    %533 = vector.broadcast %cst_84 : f32 to vector<2x32xf32>
    %534 = arith.addf %533, %532 : vector<2x32xf32>
    %535 = arith.divf %533, %534 : vector<2x32xf32>
    %536 = vector.extract_strided_slice %523 {offsets = [0, 64], sizes = [2, 32], strides = [1, 1]} : vector<2x128xf32> to vector<2x32xf32>
    %537 = math.tanh %536 : vector<2x32xf32>
    %538 = vector.extract_strided_slice %523 {offsets = [0, 96], sizes = [2, 32], strides = [1, 1]} : vector<2x128xf32> to vector<2x32xf32>
    %539 = arith.negf %538 : vector<2x32xf32>
    %540 = math.exp %539 : vector<2x32xf32>
    %cst_85 = arith.constant 1.000000e+00 : f32
    %541 = vector.broadcast %cst_85 : f32 to vector<2x32xf32>
    %542 = arith.addf %541, %540 : vector<2x32xf32>
    %543 = arith.divf %541, %542 : vector<2x32xf32>
    %544 = arith.mulf %535, %518 : vector<2x32xf32>
    %545 = arith.mulf %529, %537 : vector<2x32xf32>
    %546 = arith.addf %544, %545 : vector<2x32xf32>
    %547 = math.tanh %546 : vector<2x32xf32>
    %548 = arith.mulf %543, %547 : vector<2x32xf32>
    %549 = vector.extract_strided_slice %490 {offsets = [4, 0], sizes = [2, 128], strides = [1, 1]} : vector<16x128xf32> to vector<2x128xf32>
    %cst_86 = arith.constant dense<0.000000e+00> : vector<2x128xf32>
    %550 = tpu.matmul %548, %491, %cst_86 {dimension_numbers = #tpu.dot_dimension_numbers<[1], [0], [0], [1], [0, 0, 1, 1], [], []>} : vector<2x32xf32>, vector<32x128xf32>, vector<2x128xf32> -> vector<2x128xf32>
    %551 = arith.addf %549, %550 : vector<2x128xf32>
    %552 = vector.extract_strided_slice %551 {offsets = [0, 0], sizes = [2, 32], strides = [1, 1]} : vector<2x128xf32> to vector<2x32xf32>
    %553 = arith.negf %552 : vector<2x32xf32>
    %554 = math.exp %553 : vector<2x32xf32>
    %cst_87 = arith.constant 1.000000e+00 : f32
    %555 = vector.broadcast %cst_87 : f32 to vector<2x32xf32>
    %556 = arith.addf %555, %554 : vector<2x32xf32>
    %557 = arith.divf %555, %556 : vector<2x32xf32>
    %558 = vector.extract_strided_slice %551 {offsets = [0, 32], sizes = [2, 32], strides = [1, 1]} : vector<2x128xf32> to vector<2x32xf32>
    %559 = arith.negf %558 : vector<2x32xf32>
    %560 = math.exp %559 : vector<2x32xf32>
    %cst_88 = arith.constant 1.000000e+00 : f32
    %561 = vector.broadcast %cst_88 : f32 to vector<2x32xf32>
    %562 = arith.addf %561, %560 : vector<2x32xf32>
    %563 = arith.divf %561, %562 : vector<2x32xf32>
    %564 = vector.extract_strided_slice %551 {offsets = [0, 64], sizes = [2, 32], strides = [1, 1]} : vector<2x128xf32> to vector<2x32xf32>
    %565 = math.tanh %564 : vector<2x32xf32>
    %566 = vector.extract_strided_slice %551 {offsets = [0, 96], sizes = [2, 32], strides = [1, 1]} : vector<2x128xf32> to vector<2x32xf32>
    %567 = arith.negf %566 : vector<2x32xf32>
    %568 = math.exp %567 : vector<2x32xf32>
    %cst_89 = arith.constant 1.000000e+00 : f32
    %569 = vector.broadcast %cst_89 : f32 to vector<2x32xf32>
    %570 = arith.addf %569, %568 : vector<2x32xf32>
    %571 = arith.divf %569, %570 : vector<2x32xf32>
    %572 = arith.mulf %563, %546 : vector<2x32xf32>
    %573 = arith.mulf %557, %565 : vector<2x32xf32>
    %574 = arith.addf %572, %573 : vector<2x32xf32>
    %575 = math.tanh %574 : vector<2x32xf32>
    %576 = arith.mulf %571, %575 : vector<2x32xf32>
    %577 = vector.extract_strided_slice %490 {offsets = [6, 0], sizes = [2, 128], strides = [1, 1]} : vector<16x128xf32> to vector<2x128xf32>
    %cst_90 = arith.constant dense<0.000000e+00> : vector<2x128xf32>
    %578 = tpu.matmul %576, %491, %cst_90 {dimension_numbers = #tpu.dot_dimension_numbers<[1], [0], [0], [1], [0, 0, 1, 1], [], []>} : vector<2x32xf32>, vector<32x128xf32>, vector<2x128xf32> -> vector<2x128xf32>
    %579 = arith.addf %577, %578 : vector<2x128xf32>
    %580 = vector.extract_strided_slice %579 {offsets = [0, 0], sizes = [2, 32], strides = [1, 1]} : vector<2x128xf32> to vector<2x32xf32>
    %581 = arith.negf %580 : vector<2x32xf32>
    %582 = math.exp %581 : vector<2x32xf32>
    %cst_91 = arith.constant 1.000000e+00 : f32
    %583 = vector.broadcast %cst_91 : f32 to vector<2x32xf32>
    %584 = arith.addf %583, %582 : vector<2x32xf32>
    %585 = arith.divf %583, %584 : vector<2x32xf32>
    %586 = vector.extract_strided_slice %579 {offsets = [0, 32], sizes = [2, 32], strides = [1, 1]} : vector<2x128xf32> to vector<2x32xf32>
    %587 = arith.negf %586 : vector<2x32xf32>
    %588 = math.exp %587 : vector<2x32xf32>
    %cst_92 = arith.constant 1.000000e+00 : f32
    %589 = vector.broadcast %cst_92 : f32 to vector<2x32xf32>
    %590 = arith.addf %589, %588 : vector<2x32xf32>
    %591 = arith.divf %589, %590 : vector<2x32xf32>
    %592 = vector.extract_strided_slice %579 {offsets = [0, 64], sizes = [2, 32], strides = [1, 1]} : vector<2x128xf32> to vector<2x32xf32>
    %593 = math.tanh %592 : vector<2x32xf32>
    %594 = vector.extract_strided_slice %579 {offsets = [0, 96], sizes = [2, 32], strides = [1, 1]} : vector<2x128xf32> to vector<2x32xf32>
    %595 = arith.negf %594 : vector<2x32xf32>
    %596 = math.exp %595 : vector<2x32xf32>
    %cst_93 = arith.constant 1.000000e+00 : f32
    %597 = vector.broadcast %cst_93 : f32 to vector<2x32xf32>
    %598 = arith.addf %597, %596 : vector<2x32xf32>
    %599 = arith.divf %597, %598 : vector<2x32xf32>
    %600 = arith.mulf %591, %574 : vector<2x32xf32>
    %601 = arith.mulf %585, %593 : vector<2x32xf32>
    %602 = arith.addf %600, %601 : vector<2x32xf32>
    %603 = math.tanh %602 : vector<2x32xf32>
    %604 = arith.mulf %599, %603 : vector<2x32xf32>
    %605 = vector.extract_strided_slice %490 {offsets = [8, 0], sizes = [2, 128], strides = [1, 1]} : vector<16x128xf32> to vector<2x128xf32>
    %cst_94 = arith.constant dense<0.000000e+00> : vector<2x128xf32>
    %606 = tpu.matmul %604, %491, %cst_94 {dimension_numbers = #tpu.dot_dimension_numbers<[1], [0], [0], [1], [0, 0, 1, 1], [], []>} : vector<2x32xf32>, vector<32x128xf32>, vector<2x128xf32> -> vector<2x128xf32>
    %607 = arith.addf %605, %606 : vector<2x128xf32>
    %608 = vector.extract_strided_slice %607 {offsets = [0, 0], sizes = [2, 32], strides = [1, 1]} : vector<2x128xf32> to vector<2x32xf32>
    %609 = arith.negf %608 : vector<2x32xf32>
    %610 = math.exp %609 : vector<2x32xf32>
    %cst_95 = arith.constant 1.000000e+00 : f32
    %611 = vector.broadcast %cst_95 : f32 to vector<2x32xf32>
    %612 = arith.addf %611, %610 : vector<2x32xf32>
    %613 = arith.divf %611, %612 : vector<2x32xf32>
    %614 = vector.extract_strided_slice %607 {offsets = [0, 32], sizes = [2, 32], strides = [1, 1]} : vector<2x128xf32> to vector<2x32xf32>
    %615 = arith.negf %614 : vector<2x32xf32>
    %616 = math.exp %615 : vector<2x32xf32>
    %cst_96 = arith.constant 1.000000e+00 : f32
    %617 = vector.broadcast %cst_96 : f32 to vector<2x32xf32>
    %618 = arith.addf %617, %616 : vector<2x32xf32>
    %619 = arith.divf %617, %618 : vector<2x32xf32>
    %620 = vector.extract_strided_slice %607 {offsets = [0, 64], sizes = [2, 32], strides = [1, 1]} : vector<2x128xf32> to vector<2x32xf32>
    %621 = math.tanh %620 : vector<2x32xf32>
    %622 = vector.extract_strided_slice %607 {offsets = [0, 96], sizes = [2, 32], strides = [1, 1]} : vector<2x128xf32> to vector<2x32xf32>
    %623 = arith.negf %622 : vector<2x32xf32>
    %624 = math.exp %623 : vector<2x32xf32>
    %cst_97 = arith.constant 1.000000e+00 : f32
    %625 = vector.broadcast %cst_97 : f32 to vector<2x32xf32>
    %626 = arith.addf %625, %624 : vector<2x32xf32>
    %627 = arith.divf %625, %626 : vector<2x32xf32>
    %628 = arith.mulf %619, %602 : vector<2x32xf32>
    %629 = arith.mulf %613, %621 : vector<2x32xf32>
    %630 = arith.addf %628, %629 : vector<2x32xf32>
    %631 = math.tanh %630 : vector<2x32xf32>
    %632 = arith.mulf %627, %631 : vector<2x32xf32>
    %633 = vector.extract_strided_slice %490 {offsets = [10, 0], sizes = [2, 128], strides = [1, 1]} : vector<16x128xf32> to vector<2x128xf32>
    %cst_98 = arith.constant dense<0.000000e+00> : vector<2x128xf32>
    %634 = tpu.matmul %632, %491, %cst_98 {dimension_numbers = #tpu.dot_dimension_numbers<[1], [0], [0], [1], [0, 0, 1, 1], [], []>} : vector<2x32xf32>, vector<32x128xf32>, vector<2x128xf32> -> vector<2x128xf32>
    %635 = arith.addf %633, %634 : vector<2x128xf32>
    %636 = vector.extract_strided_slice %635 {offsets = [0, 0], sizes = [2, 32], strides = [1, 1]} : vector<2x128xf32> to vector<2x32xf32>
    %637 = arith.negf %636 : vector<2x32xf32>
    %638 = math.exp %637 : vector<2x32xf32>
    %cst_99 = arith.constant 1.000000e+00 : f32
    %639 = vector.broadcast %cst_99 : f32 to vector<2x32xf32>
    %640 = arith.addf %639, %638 : vector<2x32xf32>
    %641 = arith.divf %639, %640 : vector<2x32xf32>
    %642 = vector.extract_strided_slice %635 {offsets = [0, 32], sizes = [2, 32], strides = [1, 1]} : vector<2x128xf32> to vector<2x32xf32>
    %643 = arith.negf %642 : vector<2x32xf32>
    %644 = math.exp %643 : vector<2x32xf32>
    %cst_100 = arith.constant 1.000000e+00 : f32
    %645 = vector.broadcast %cst_100 : f32 to vector<2x32xf32>
    %646 = arith.addf %645, %644 : vector<2x32xf32>
    %647 = arith.divf %645, %646 : vector<2x32xf32>
    %648 = vector.extract_strided_slice %635 {offsets = [0, 64], sizes = [2, 32], strides = [1, 1]} : vector<2x128xf32> to vector<2x32xf32>
    %649 = math.tanh %648 : vector<2x32xf32>
    %650 = vector.extract_strided_slice %635 {offsets = [0, 96], sizes = [2, 32], strides = [1, 1]} : vector<2x128xf32> to vector<2x32xf32>
    %651 = arith.negf %650 : vector<2x32xf32>
    %652 = math.exp %651 : vector<2x32xf32>
    %cst_101 = arith.constant 1.000000e+00 : f32
    %653 = vector.broadcast %cst_101 : f32 to vector<2x32xf32>
    %654 = arith.addf %653, %652 : vector<2x32xf32>
    %655 = arith.divf %653, %654 : vector<2x32xf32>
    %656 = arith.mulf %647, %630 : vector<2x32xf32>
    %657 = arith.mulf %641, %649 : vector<2x32xf32>
    %658 = arith.addf %656, %657 : vector<2x32xf32>
    %659 = math.tanh %658 : vector<2x32xf32>
    %660 = arith.mulf %655, %659 : vector<2x32xf32>
    %661 = vector.extract_strided_slice %490 {offsets = [12, 0], sizes = [2, 128], strides = [1, 1]} : vector<16x128xf32> to vector<2x128xf32>
    %cst_102 = arith.constant dense<0.000000e+00> : vector<2x128xf32>
    %662 = tpu.matmul %660, %491, %cst_102 {dimension_numbers = #tpu.dot_dimension_numbers<[1], [0], [0], [1], [0, 0, 1, 1], [], []>} : vector<2x32xf32>, vector<32x128xf32>, vector<2x128xf32> -> vector<2x128xf32>
    %663 = arith.addf %661, %662 : vector<2x128xf32>
    %664 = vector.extract_strided_slice %663 {offsets = [0, 0], sizes = [2, 32], strides = [1, 1]} : vector<2x128xf32> to vector<2x32xf32>
    %665 = arith.negf %664 : vector<2x32xf32>
    %666 = math.exp %665 : vector<2x32xf32>
    %cst_103 = arith.constant 1.000000e+00 : f32
    %667 = vector.broadcast %cst_103 : f32 to vector<2x32xf32>
    %668 = arith.addf %667, %666 : vector<2x32xf32>
    %669 = arith.divf %667, %668 : vector<2x32xf32>
    %670 = vector.extract_strided_slice %663 {offsets = [0, 32], sizes = [2, 32], strides = [1, 1]} : vector<2x128xf32> to vector<2x32xf32>
    %671 = arith.negf %670 : vector<2x32xf32>
    %672 = math.exp %671 : vector<2x32xf32>
    %cst_104 = arith.constant 1.000000e+00 : f32
    %673 = vector.broadcast %cst_104 : f32 to vector<2x32xf32>
    %674 = arith.addf %673, %672 : vector<2x32xf32>
    %675 = arith.divf %673, %674 : vector<2x32xf32>
    %676 = vector.extract_strided_slice %663 {offsets = [0, 64], sizes = [2, 32], strides = [1, 1]} : vector<2x128xf32> to vector<2x32xf32>
    %677 = math.tanh %676 : vector<2x32xf32>
    %678 = vector.extract_strided_slice %663 {offsets = [0, 96], sizes = [2, 32], strides = [1, 1]} : vector<2x128xf32> to vector<2x32xf32>
    %679 = arith.negf %678 : vector<2x32xf32>
    %680 = math.exp %679 : vector<2x32xf32>
    %cst_105 = arith.constant 1.000000e+00 : f32
    %681 = vector.broadcast %cst_105 : f32 to vector<2x32xf32>
    %682 = arith.addf %681, %680 : vector<2x32xf32>
    %683 = arith.divf %681, %682 : vector<2x32xf32>
    %684 = arith.mulf %675, %658 : vector<2x32xf32>
    %685 = arith.mulf %669, %677 : vector<2x32xf32>
    %686 = arith.addf %684, %685 : vector<2x32xf32>
    %687 = math.tanh %686 : vector<2x32xf32>
    %688 = arith.mulf %683, %687 : vector<2x32xf32>
    %689 = vector.extract_strided_slice %490 {offsets = [14, 0], sizes = [2, 128], strides = [1, 1]} : vector<16x128xf32> to vector<2x128xf32>
    %cst_106 = arith.constant dense<0.000000e+00> : vector<2x128xf32>
    %690 = tpu.matmul %688, %491, %cst_106 {dimension_numbers = #tpu.dot_dimension_numbers<[1], [0], [0], [1], [0, 0, 1, 1], [], []>} : vector<2x32xf32>, vector<32x128xf32>, vector<2x128xf32> -> vector<2x128xf32>
    %691 = arith.addf %689, %690 : vector<2x128xf32>
    %692 = vector.extract_strided_slice %691 {offsets = [0, 0], sizes = [2, 32], strides = [1, 1]} : vector<2x128xf32> to vector<2x32xf32>
    %693 = arith.negf %692 : vector<2x32xf32>
    %694 = math.exp %693 : vector<2x32xf32>
    %cst_107 = arith.constant 1.000000e+00 : f32
    %695 = vector.broadcast %cst_107 : f32 to vector<2x32xf32>
    %696 = arith.addf %695, %694 : vector<2x32xf32>
    %697 = arith.divf %695, %696 : vector<2x32xf32>
    %698 = vector.extract_strided_slice %691 {offsets = [0, 32], sizes = [2, 32], strides = [1, 1]} : vector<2x128xf32> to vector<2x32xf32>
    %699 = arith.negf %698 : vector<2x32xf32>
    %700 = math.exp %699 : vector<2x32xf32>
    %cst_108 = arith.constant 1.000000e+00 : f32
    %701 = vector.broadcast %cst_108 : f32 to vector<2x32xf32>
    %702 = arith.addf %701, %700 : vector<2x32xf32>
    %703 = arith.divf %701, %702 : vector<2x32xf32>
    %704 = vector.extract_strided_slice %691 {offsets = [0, 64], sizes = [2, 32], strides = [1, 1]} : vector<2x128xf32> to vector<2x32xf32>
    %705 = math.tanh %704 : vector<2x32xf32>
    %706 = vector.extract_strided_slice %691 {offsets = [0, 96], sizes = [2, 32], strides = [1, 1]} : vector<2x128xf32> to vector<2x32xf32>
    %707 = arith.negf %706 : vector<2x32xf32>
    %708 = math.exp %707 : vector<2x32xf32>
    %cst_109 = arith.constant 1.000000e+00 : f32
    %709 = vector.broadcast %cst_109 : f32 to vector<2x32xf32>
    %710 = arith.addf %709, %708 : vector<2x32xf32>
    %711 = arith.divf %709, %710 : vector<2x32xf32>
    %712 = arith.mulf %703, %686 : vector<2x32xf32>
    %713 = arith.mulf %697, %705 : vector<2x32xf32>
    %714 = arith.addf %712, %713 : vector<2x32xf32>
    %715 = math.tanh %714 : vector<2x32xf32>
    %716 = arith.mulf %711, %715 : vector<2x32xf32>
    %717 = vector.extract_strided_slice %485 {offsets = [14, 0], sizes = [2, 64], strides = [1, 1]} : vector<16x64xf32> to vector<2x64xf32>
    %c0_110 = arith.constant 0 : index
    %c0_111 = arith.constant 0 : index
    %718 = vector.load %arg9[%c0_110, %c0_111] : memref<64x128xf32, #tpu.memory_space<vmem>>, vector<64x128xf32>
    %cst_112 = arith.constant dense<0.000000e+00> : vector<2x128xf32>
    %719 = tpu.matmul %717, %718, %cst_112 {dimension_numbers = #tpu.dot_dimension_numbers<[1], [0], [0], [1], [0, 0, 1, 1], [], []>} : vector<2x64xf32>, vector<64x128xf32>, vector<2x128xf32> -> vector<2x128xf32>
    %c0_113 = arith.constant 0 : index
    %c0_114 = arith.constant 0 : index
    %720 = vector.load %arg10[%c0_113, %c0_114] : memref<1x128xf32, #tpu.memory_space<vmem>>, vector<1x128xf32>
    %721 = vector.broadcast %720 : vector<1x128xf32> to vector<2x128xf32>
    %722 = arith.addf %719, %721 : vector<2x128xf32>
    %723 = vector.extract_strided_slice %722 {offsets = [0, 0], sizes = [2, 32], strides = [1, 1]} : vector<2x128xf32> to vector<2x32xf32>
    %724 = arith.negf %723 : vector<2x32xf32>
    %725 = math.exp %724 : vector<2x32xf32>
    %cst_115 = arith.constant 1.000000e+00 : f32
    %726 = vector.broadcast %cst_115 : f32 to vector<2x32xf32>
    %727 = arith.addf %726, %725 : vector<2x32xf32>
    %728 = arith.divf %726, %727 : vector<2x32xf32>
    %729 = vector.extract_strided_slice %722 {offsets = [0, 32], sizes = [2, 32], strides = [1, 1]} : vector<2x128xf32> to vector<2x32xf32>
    %730 = arith.negf %729 : vector<2x32xf32>
    %731 = math.exp %730 : vector<2x32xf32>
    %cst_116 = arith.constant 1.000000e+00 : f32
    %732 = vector.broadcast %cst_116 : f32 to vector<2x32xf32>
    %733 = arith.addf %732, %731 : vector<2x32xf32>
    %734 = arith.divf %732, %733 : vector<2x32xf32>
    %735 = vector.extract_strided_slice %722 {offsets = [0, 64], sizes = [2, 32], strides = [1, 1]} : vector<2x128xf32> to vector<2x32xf32>
    %736 = math.tanh %735 : vector<2x32xf32>
    %737 = vector.extract_strided_slice %722 {offsets = [0, 96], sizes = [2, 32], strides = [1, 1]} : vector<2x128xf32> to vector<2x32xf32>
    %738 = arith.negf %737 : vector<2x32xf32>
    %739 = math.exp %738 : vector<2x32xf32>
    %cst_117 = arith.constant 1.000000e+00 : f32
    %740 = vector.broadcast %cst_117 : f32 to vector<2x32xf32>
    %741 = arith.addf %740, %739 : vector<2x32xf32>
    %742 = arith.divf %740, %741 : vector<2x32xf32>
    %743 = arith.mulf %734, %492 : vector<2x32xf32>
    %744 = arith.mulf %728, %736 : vector<2x32xf32>
    %745 = arith.addf %743, %744 : vector<2x32xf32>
    %746 = math.tanh %745 : vector<2x32xf32>
    %747 = arith.mulf %742, %746 : vector<2x32xf32>
    %748 = tpu.concatenate %716, %747 in 1 : vector<2x32xf32>, vector<2x32xf32> -> vector<2x64xf32>
    %c0_118 = arith.constant 0 : index
    %c0_119 = arith.constant 0 : index
    %749 = vector.load %arg11[%c0_118, %c0_119] : memref<64x8xf32, #tpu.memory_space<vmem>>, vector<64x8xf32>
    %cst_120 = arith.constant dense<0.000000e+00> : vector<2x8xf32>
    %750 = tpu.matmul %748, %749, %cst_120 {dimension_numbers = #tpu.dot_dimension_numbers<[1], [0], [0], [1], [0, 0, 1, 1], [], []>} : vector<2x64xf32>, vector<64x8xf32>, vector<2x8xf32> -> vector<2x8xf32>
    %c0_121 = arith.constant 0 : index
    %c0_122 = arith.constant 0 : index
    %751 = vector.load %arg12[%c0_121, %c0_122] : memref<1x8xf32, #tpu.memory_space<vmem>>, vector<1x8xf32>
    %752 = vector.broadcast %751 : vector<1x8xf32> to vector<2x8xf32>
    %753 = arith.addf %750, %752 : vector<2x8xf32>
    %c0_123 = arith.constant 0 : index
    %c0_124 = arith.constant 0 : index
    %754 = vector.load %arg13[%c0_123, %c0_124] : memref<2x8xf32, #tpu.memory_space<vmem>>, vector<2x8xf32>
    tpu.vector_store %arg13[%c0_123, %c0_124], %753 {strides = array<i32>} : memref<2x8xf32, #tpu.memory_space<vmem>>, vector<2x8xf32>,
    return
  }
}

</mosaic_0001>

<llo_original>
// kernel: bicustom_lstm_forward.1
$region0: #{bicustom_lstm_forward.1}
  #allocation0 [shape = 'u32[]', space=smem, size = 0x4, offset = 0x4, fixed_abs, tag = 'smem constant byte address 0x4 - core index']
  #allocation1 [shape = 'u32[72,128]{1,0:T(1,128)}', space=vmem, size = 0x9000, scoped, tag = 'internal scratch']
  %s0 = inlined_call_operand.vmem [shape: f32[16,16], index: 0, kind: input, shape index: {}]
  %s1 = inlined_call_operand.vmem [shape: f32[16,128], index: 1, kind: input, shape index: {}]
  %s2 = inlined_call_operand.vmem [shape: f32[16,128], index: 2, kind: input, shape index: {}]
  %s3 = inlined_call_operand.vmem [shape: f32[1,128], index: 3, kind: input, shape index: {}]
  %s4 = inlined_call_operand.vmem [shape: f32[1,128], index: 4, kind: input, shape index: {}]
  %s5 = inlined_call_operand.vmem [shape: f32[64,256], index: 5, kind: input, shape index: {}]
  %s6 = inlined_call_operand.vmem [shape: f32[64,128], index: 6, kind: input, shape index: {}]
  %s7 = inlined_call_operand.vmem [shape: f32[32,128], index: 7, kind: input, shape index: {}]
  %s8 = inlined_call_operand.vmem [shape: f32[1,128], index: 8, kind: input, shape index: {}]
  %s9 = inlined_call_operand.vmem [shape: f32[64,128], index: 9, kind: input, shape index: {}]
  %s10 = inlined_call_operand.vmem [shape: f32[1,128], index: 10, kind: input, shape index: {}]
  %s11 = inlined_call_operand.vmem [shape: f32[64,8], index: 11, kind: input, shape index: {}]
  %s12 = inlined_call_operand.vmem [shape: f32[1,8], index: 12, kind: input, shape index: {}]
  %s13 = inlined_call_operand.hbm [shape: f32[2,8], index: 13, kind: output, shape index: {}]
  %s14 = sld [smem:[#allocation0]]
  $region62: #{bicustom_lstm_forward.1} parent=0
    _
  %s16 = ssub.s32 1, %s14
  %s17 = scalar_select 0, %s16, %s14
  $region1: #{bicustom_lstm_forward.1} parent=0
    #allocation2 [shape = 'u8[1024]{0}', space=vmem, size = 0x400, scoped, tag = 'output window, operand 0, single buffered']
    #allocation3 [shape = 's32[1]{0}', space=sflag, size = 0x4, scoped, tag = 'scoped memory for bicustom_lstm_forward.1']
    %18 = vsyncpa [#allocation3], 0
    // Predicated region
    $region2: #{bicustom_lstm_forward.1} parent=1 // pred_check
      _
    $region3: #{bicustom_lstm_forward.1} parent=1 // pred_check_branch
      %20 = sbr.rel (0) target = $region5
    $region4: #{bicustom_lstm_forward.1} parent=1 // pred_region
      _
    $region5: #{bicustom_lstm_forward.1} parent=1 // pred_fallthru
      _
    // Predicated region
    $region6: #{bicustom_lstm_forward.1} parent=1 // pred_check
      _
    $region7: #{bicustom_lstm_forward.1} parent=1 // pred_check_branch
      %22 = sbr.rel (0) target = $region9
    $region8: #{bicustom_lstm_forward.1} parent=1 // pred_region
      _
    $region9: #{bicustom_lstm_forward.1} parent=1 // pred_fallthru
      _
    // Predicated region
    $region10: #{bicustom_lstm_forward.1} parent=1 // pred_check
      _
    $region11: #{bicustom_lstm_forward.1} parent=1 // pred_check_branch
      %24 = sbr.rel (0) target = $region13
    $region12: #{bicustom_lstm_forward.1} parent=1 // pred_region
      _
    $region13: #{bicustom_lstm_forward.1} parent=1 // pred_fallthru
      _
    // Predicated region
    $region14: #{bicustom_lstm_forward.1} parent=1 // pred_check
      _
    $region15: #{bicustom_lstm_forward.1} parent=1 // pred_check_branch
      %26 = sbr.rel (0) target = $region17
    $region16: #{bicustom_lstm_forward.1} parent=1 // pred_region
      _
    $region17: #{bicustom_lstm_forward.1} parent=1 // pred_fallthru
      _
    // Predicated region
    $region18: #{bicustom_lstm_forward.1} parent=1 // pred_check
      _
    $region19: #{bicustom_lstm_forward.1} parent=1 // pred_check_branch
      %28 = sbr.rel (0) target = $region21
    $region20: #{bicustom_lstm_forward.1} parent=1 // pred_region
      _
    $region21: #{bicustom_lstm_forward.1} parent=1 // pred_fallthru
      _
    // Predicated region
    $region22: #{bicustom_lstm_forward.1} parent=1 // pred_check
      _
    $region23: #{bicustom_lstm_forward.1} parent=1 // pred_check_branch
      %30 = sbr.rel (0) target = $region25
    $region24: #{bicustom_lstm_forward.1} parent=1 // pred_region
      _
    $region25: #{bicustom_lstm_forward.1} parent=1 // pred_fallthru
      _
    // Predicated region
    $region26: #{bicustom_lstm_forward.1} parent=1 // pred_check
      _
    $region27: #{bicustom_lstm_forward.1} parent=1 // pred_check_branch
      %32 = sbr.rel (0) target = $region29
    $region28: #{bicustom_lstm_forward.1} parent=1 // pred_region
      _
    $region29: #{bicustom_lstm_forward.1} parent=1 // pred_fallthru
      _
    // Predicated region
    $region30: #{bicustom_lstm_forward.1} parent=1 // pred_check
      _
    $region31: #{bicustom_lstm_forward.1} parent=1 // pred_check_branch
      %34 = sbr.rel (0) target = $region33
    $region32: #{bicustom_lstm_forward.1} parent=1 // pred_region
      _
    $region33: #{bicustom_lstm_forward.1} parent=1 // pred_fallthru
      _
    // Predicated region
    $region34: #{bicustom_lstm_forward.1} parent=1 // pred_check
      _
    $region35: #{bicustom_lstm_forward.1} parent=1 // pred_check_branch
      %36 = sbr.rel (0) target = $region37
    $region36: #{bicustom_lstm_forward.1} parent=1 // pred_region
      _
    $region37: #{bicustom_lstm_forward.1} parent=1 // pred_fallthru
      _
    // Predicated region
    $region38: #{bicustom_lstm_forward.1} parent=1 // pred_check
      _
    $region39: #{bicustom_lstm_forward.1} parent=1 // pred_check_branch
      %38 = sbr.rel (0) target = $region41
    $region40: #{bicustom_lstm_forward.1} parent=1 // pred_region
      _
    $region41: #{bicustom_lstm_forward.1} parent=1 // pred_fallthru
      _
    // Predicated region
    $region42: #{bicustom_lstm_forward.1} parent=1 // pred_check
      _
    $region43: #{bicustom_lstm_forward.1} parent=1 // pred_check_branch
      %40 = sbr.rel (0) target = $region45
    $region44: #{bicustom_lstm_forward.1} parent=1 // pred_region
      _
    $region45: #{bicustom_lstm_forward.1} parent=1 // pred_fallthru
      _
    // Predicated region
    $region46: #{bicustom_lstm_forward.1} parent=1 // pred_check
      _
    $region47: #{bicustom_lstm_forward.1} parent=1 // pred_check_branch
      %42 = sbr.rel (0) target = $region49
    $region48: #{bicustom_lstm_forward.1} parent=1 // pred_region
      _
    $region49: #{bicustom_lstm_forward.1} parent=1 // pred_fallthru
      _
    // Predicated region
    $region50: #{bicustom_lstm_forward.1} parent=1 // pred_check
      _
    $region51: #{bicustom_lstm_forward.1} parent=1 // pred_check_branch
      %44 = sbr.rel (0) target = $region53
    $region52: #{bicustom_lstm_forward.1} parent=1 // pred_region
      _
    $region53: #{bicustom_lstm_forward.1} parent=1 // pred_fallthru
      _
    %v45 = vld [vmem:[%s0] sm:$0xff]
    %v46 = vld [vmem:[%s0 + $0x8] sm:$0xff]
    %v47 = vld [vmem:[%s1] sm:$0xff]
    %v48 = vld [vmem:[%s1 + $0x8] sm:$0xff]
    %v49 = vld [vmem:[%s3] sm:$0x1]
    %v51 = vperm.slane %v49, 0
    %vm53 = vcmask 130048
    %v55 = vsel %vm53, %v45, 0
    %v58 = vsel %vm53, %v46, 0
    %60 = vmatpush.msra.mxu0 0.0
    %61 = vmatpush.msra.mxu0 0.0
    %62 = vmatpush.msra.mxu0 0.0
    %63 = vmatpush.msra.mxu0 0.0
    %64 = vmatpush.msra.mxu0 0.0
    %65 = vmatpush.msra.mxu0 0.0
    %66 = vmatpush.msra.mxu0 0.0
    %67 = vmatpush.msra.mxu0 0.0
    %68 = vmatpush.msra.mxu0 0.0
    %69 = vmatpush.msra.mxu0 0.0
    %70 = vmatpush.msra.mxu0 0.0
    %71 = vmatpush.msra.mxu0 0.0
    %72 = vmatpush.msra.mxu0 0.0
    %73 = vmatpush.msra.mxu0 0.0
    %74 = vmatpush.msra.mxu0 %v48
    %75 = vmatpush.msra.mxu0 %v47
    %76 = vmatmul.f32.gmra.mxu0 %v55
    %v77 = vpop.f32.mrf.mxu0
    %v78 = vadd.f32 %v51, %v77
    %79 = vmatmul.f32.gmra.mxu0 %v58
    %v80 = vpop.f32.mrf.mxu0
    %v81 = vadd.f32 %v51, %v80
    %82 = vdwg.mxu0
    %v83 = vld [vmem:[%s2] sm:$0xff]
    %v84 = vld [vmem:[%s2 + $0x8] sm:$0xff]
    %v85 = vld [vmem:[%s4] sm:$0x1]
    %v87 = vperm.slane %v85, 0
    %89 = vmatpush.msra.mxu0 0.0
    %90 = vmatpush.msra.mxu0 0.0
    %91 = vmatpush.msra.mxu0 0.0
    %92 = vmatpush.msra.mxu0 0.0
    %93 = vmatpush.msra.mxu0 0.0
    %94 = vmatpush.msra.mxu0 0.0
    %95 = vmatpush.msra.mxu0 0.0
    %96 = vmatpush.msra.mxu0 0.0
    %97 = vmatpush.msra.mxu0 0.0
    %98 = vmatpush.msra.mxu0 0.0
    %99 = vmatpush.msra.mxu0 0.0
    %100 = vmatpush.msra.mxu0 0.0
    %101 = vmatpush.msra.mxu0 0.0
    %102 = vmatpush.msra.mxu0 0.0
    %103 = vmatpush.msra.mxu0 %v84
    %104 = vmatpush.msra.mxu0 %v83
    %105 = vmatmul.f32.gmra.mxu0 %v55
    %v106 = vpop.f32.mrf.mxu0
    %v107 = vadd.f32 %v87, %v106
    %108 = vmatmul.f32.gmra.mxu0 %v58
    %v109 = vpop.f32.mrf.mxu0
    %v110 = vadd.f32 %v87, %v109
    %111 = vdwg.mxu0
    %v112 = vld [vmem:[%s5] sm:$0xff]
    %v113 = vld [vmem:[%s5 + $0x8] sm:$0xff]
    %v114 = vld [vmem:[%s5 + $0x10] sm:$0xff]
    %v115 = vld [vmem:[%s5 + $0x18] sm:$0xff]
    %v116 = vld [vmem:[%s5 + $0x20] sm:$0xff]
    %v117 = vld [vmem:[%s5 + $0x28] sm:$0xff]
    %v118 = vld [vmem:[%s5 + $0x30] sm:$0xff]
    %v119 = vld [vmem:[%s5 + $0x38] sm:$0xff]
    %v120 = vld [vmem:[%s5 + $0x40] sm:$0xff]
    %v121 = vld [vmem:[%s5 + $0x48] sm:$0xff]
    %v122 = vld [vmem:[%s5 + $0x50] sm:$0xff]
    %v123 = vld [vmem:[%s5 + $0x58] sm:$0xff]
    %v124 = vld [vmem:[%s5 + $0x60] sm:$0xff]
    %v125 = vld [vmem:[%s5 + $0x68] sm:$0xff]
    %v126 = vld [vmem:[%s5 + $0x70] sm:$0xff]
    %v127 = vld [vmem:[%s5 + $0x78] sm:$0xff]
    %v129 = vrot.slane %v110, 6
    %vm131 = vcmask 523264
    %v133 = vsel %vm131, 0.0, 0
    %135 = vmatpush.msra.mxu0 0.0
    %136 = vmatpush.msra.mxu0 0.0
    %137 = vmatpush.msra.mxu0 0.0
    %138 = vmatpush.msra.mxu0 0.0
    %139 = vmatpush.msra.mxu0 0.0
    %140 = vmatpush.msra.mxu0 0.0
    %141 = vmatpush.msra.mxu0 0.0
    %142 = vmatpush.msra.mxu0 0.0
    %143 = vmatpush.msra.mxu0 %v126
    %144 = vmatpush.msra.mxu0 %v124
    %145 = vmatpush.msra.mxu0 %v122
    %146 = vmatpush.msra.mxu0 %v120
    %147 = vmatpush.msra.mxu0 %v118
    %148 = vmatpush.msra.mxu0 %v116
    %149 = vmatpush.msra.mxu0 %v114
    %150 = vmatpush.msra.mxu0 %v112
    %151 = vmatmul.f32.gmra.mxu0 %v133
    %v152 = vpop.f32.mrf.mxu0
    %v153 = vadd.f32 0.0, %v152
    %154 = vdwg.mxu0
    %155 = vmatpush.msra.mxu0 0.0
    %156 = vmatpush.msra.mxu0 0.0
    %157 = vmatpush.msra.mxu0 0.0
    %158 = vmatpush.msra.mxu0 0.0
    %159 = vmatpush.msra.mxu0 0.0
    %160 = vmatpush.msra.mxu0 0.0
    %161 = vmatpush.msra.mxu0 0.0
    %162 = vmatpush.msra.mxu0 0.0
    %163 = vmatpush.msra.mxu0 %v127
    %164 = vmatpush.msra.mxu0 %v125
    %165 = vmatpush.msra.mxu0 %v123
    %166 = vmatpush.msra.mxu0 %v121
    %167 = vmatpush.msra.mxu0 %v119
    %168 = vmatpush.msra.mxu0 %v117
    %169 = vmatpush.msra.mxu0 %v115
    %170 = vmatpush.msra.mxu0 %v113
    %171 = vmatmul.f32.gmra.mxu0 %v133
    %v172 = vpop.f32.mrf.mxu0
    %v173 = vadd.f32 0.0, %v172
    %174 = vdwg.mxu0
    %v175 = vadd.f32 %v78, %v153
    %v176 = vadd.f32 %v129, %v173
    %v177 = vxor.u32 %v175, 2147483648
    %v178 = vmul.f32 %v177, 1.442695
    %v179 = vpow.pop %v178
    %v180 = vadd.f32 %v179, 1.0
    %v181 = vrcp.pop %v180
    %v182 = vmul.f32 %v180, %v181
    %v183 = vsub.f32 1.0, %v182
    %v184 = vmul.f32 %v181, %v183
    %v185 = vadd.f32 %v181, %v184
    %vm186 = vweird.f32 %v180
    %vm187 = vweird.f32 %v181
    %vm188 = vmor %vm186, %vm187
    %v189 = vsel %vm188, %v181, %v185
    %v190 = vand.u32 2147483647, %v180
    %vm191 = vcmp.eq.f32.partialorder %v190, 8.507059e+37
    %v192 = vand.u32 %v180, 2147483648
    %v193 = vor.u32 1.1754944e-38, %v192
    %v194 = vsel %vm191, %v193, %v189
    %v195 = vmul.f32 1.0, %v194
    %v196 = vtanh.pop %v175
    %v197 = vmul.f32 %v195, 0.0
    %199 = vrot.lane.b32.xlu0 %v196, 64
    %v200 = vpop.permute.xlu0 %199
    %v202 = vmul.f32 %v195, %v200
    %204 = vrot.lane.b32.xlu0 %v202, 32
    %v205 = vpop.permute.xlu0 %204
    %v207 = vadd.f32 %v197, %v205
    %v208 = vtanh.pop %v207
    %210 = vrot.lane.b32.xlu0 %v208, 64
    %v211 = vpop.permute.xlu0 %210
    %v213 = vmul.f32 %v195, %v211
    %v214 = vxor.u32 %v176, 2147483648
    %v215 = vmul.f32 %v214, 1.442695
    %v216 = vpow.pop %v215
    %v217 = vadd.f32 %v216, 1.0
    %v218 = vrcp.pop %v217
    %v219 = vmul.f32 %v217, %v218
    %v220 = vsub.f32 1.0, %v219
    %v221 = vmul.f32 %v218, %v220
    %v222 = vadd.f32 %v218, %v221
    %vm223 = vweird.f32 %v217
    %vm224 = vweird.f32 %v218
    %vm225 = vmor %vm223, %vm224
    %v226 = vsel %vm225, %v218, %v222
    %v227 = vand.u32 2147483647, %v217
    %vm228 = vcmp.eq.f32.partialorder %v227, 8.507059e+37
    %v229 = vand.u32 %v217, 2147483648
    %v230 = vor.u32 1.1754944e-38, %v229
    %v231 = vsel %vm228, %v230, %v226
    %v232 = vmul.f32 1.0, %v231
    %v233 = vtanh.pop %v176
    %v234 = vmul.f32 %v232, 0.0
    %236 = vrot.lane.b32.xlu0 %v233, 64
    %v237 = vpop.permute.xlu0 %236
    %v239 = vmul.f32 %v232, %v237
    %241 = vrot.lane.b32.xlu0 %v239, 32
    %v242 = vpop.permute.xlu0 %241
    %v244 = vadd.f32 %v234, %v242
    %v245 = vtanh.pop %v244
    %247 = vrot.lane.b32.xlu0 %v245, 64
    %v248 = vpop.permute.xlu0 %247
    %v250 = vmul.f32 %v232, %v248
    %252 = vrot.lane.b32.xlu0 %v213, 32
    %v253 = vpop.permute.xlu0 %252
    %256 = vrot.lane.b32.xlu0 %v250, 64
    %v257 = vpop.permute.xlu0 %256
    %vm259 = vcmask 261120
    %v260 = vsel %vm259, %v253, %v257
    %v261 = vrot.slane %v110, 2
    %v264 = vsel %vm131, %v260, 0
    %266 = vmatpush.msra.mxu0 0.0
    %267 = vmatpush.msra.mxu0 0.0
    %268 = vmatpush.msra.mxu0 0.0
    %269 = vmatpush.msra.mxu0 0.0
    %270 = vmatpush.msra.mxu0 0.0
    %271 = vmatpush.msra.mxu0 0.0
    %272 = vmatpush.msra.mxu0 0.0
    %273 = vmatpush.msra.mxu0 0.0
    %274 = vmatpush.msra.mxu0 %v126
    %275 = vmatpush.msra.mxu0 %v124
    %276 = vmatpush.msra.mxu0 %v122
    %277 = vmatpush.msra.mxu0 %v120
    %278 = vmatpush.msra.mxu0 %v118
    %279 = vmatpush.msra.mxu0 %v116
    %280 = vmatpush.msra.mxu0 %v114
    %281 = vmatpush.msra.mxu0 %v112
    %282 = vmatmul.f32.gmra.mxu0 %v264
    %v283 = vpop.f32.mrf.mxu0
    %v284 = vadd.f32 0.0, %v283
    %285 = vdwg.mxu0
    %286 = vmatpush.msra.mxu0 0.0
    %287 = vmatpush.msra.mxu0 0.0
    %288 = vmatpush.msra.mxu0 0.0
    %289 = vmatpush.msra.mxu0 0.0
    %290 = vmatpush.msra.mxu0 0.0
    %291 = vmatpush.msra.mxu0 0.0
    %292 = vmatpush.msra.mxu0 0.0
    %293 = vmatpush.msra.mxu0 0.0
    %294 = vmatpush.msra.mxu0 %v127
    %295 = vmatpush.msra.mxu0 %v125
    %296 = vmatpush.msra.mxu0 %v123
    %297 = vmatpush.msra.mxu0 %v121
    %298 = vmatpush.msra.mxu0 %v119
    %299 = vmatpush.msra.mxu0 %v117
    %300 = vmatpush.msra.mxu0 %v115
    %301 = vmatpush.msra.mxu0 %v113
    %302 = vmatmul.f32.gmra.mxu0 %v264
    %v303 = vpop.f32.mrf.mxu0
    %v304 = vadd.f32 0.0, %v303
    %305 = vdwg.mxu0
    %v308 = vrot.slane %v284, 6
    %v309 = vrot.slane %v304, 6
    %v312 = vadd.f32 %v78, %v308
    %v313 = vadd.f32 %v261, %v309
    %v314 = vxor.u32 %v312, 2147483648
    %v315 = vmul.f32 %v314, 1.442695
    %v316 = vpow.pop %v315
    %v317 = vadd.f32 %v316, 1.0
    %v318 = vrcp.pop %v317
    %v319 = vmul.f32 %v317, %v318
    %v320 = vsub.f32 1.0, %v319
    %v321 = vmul.f32 %v318, %v320
    %v322 = vadd.f32 %v318, %v321
    %vm323 = vweird.f32 %v317
    %vm324 = vweird.f32 %v318
    %vm325 = vmor %vm323, %vm324
    %v326 = vsel %vm325, %v318, %v322
    %v327 = vand.u32 2147483647, %v317
    %vm328 = vcmp.eq.f32.partialorder %v327, 8.507059e+37
    %v329 = vand.u32 %v317, 2147483648
    %v330 = vor.u32 1.1754944e-38, %v329
    %v331 = vsel %vm328, %v330, %v326
    %v332 = vmul.f32 1.0, %v331
    %v333 = vtanh.pop %v312
    %v335 = vrot.slane %v207, 6
    %v337 = vmul.f32 %v332, %v335
    %339 = vrot.lane.b32.xlu0 %v333, 64
    %v340 = vpop.permute.xlu0 %339
    %v342 = vmul.f32 %v332, %v340
    %344 = vrot.lane.b32.xlu0 %v342, 32
    %v345 = vpop.permute.xlu0 %344
    %v347 = vadd.f32 %v337, %v345
    %v348 = vtanh.pop %v347
    %350 = vrot.lane.b32.xlu0 %v348, 64
    %v351 = vpop.permute.xlu0 %350
    %v353 = vmul.f32 %v332, %v351
    %v354 = vxor.u32 %v313, 2147483648
    %v355 = vmul.f32 %v354, 1.442695
    %v356 = vpow.pop %v355
    %v357 = vadd.f32 %v356, 1.0
    %v358 = vrcp.pop %v357
    %v359 = vmul.f32 %v357, %v358
    %v360 = vsub.f32 1.0, %v359
    %v361 = vmul.f32 %v358, %v360
    %v362 = vadd.f32 %v358, %v361
    %vm363 = vweird.f32 %v357
    %vm364 = vweird.f32 %v358
    %vm365 = vmor %vm363, %vm364
    %v366 = vsel %vm365, %v358, %v362
    %v367 = vand.u32 2147483647, %v357
    %vm368 = vcmp.eq.f32.partialorder %v367, 8.507059e+37
    %v369 = vand.u32 %v357, 2147483648
    %v370 = vor.u32 1.1754944e-38, %v369
    %v371 = vsel %vm368, %v370, %v366
    %v372 = vmul.f32 1.0, %v371
    %v373 = vtanh.pop %v313
    %v375 = vrot.slane %v244, 6
    %v377 = vmul.f32 %v372, %v375
    %379 = vrot.lane.b32.xlu0 %v373, 64
    %v380 = vpop.permute.xlu0 %379
    %v382 = vmul.f32 %v372, %v380
    %384 = vrot.lane.b32.xlu0 %v382, 32
    %v385 = vpop.permute.xlu0 %384
    %v387 = vadd.f32 %v377, %v385
    %v388 = vtanh.pop %v387
    %390 = vrot.lane.b32.xlu0 %v388, 64
    %v391 = vpop.permute.xlu0 %390
    %v393 = vmul.f32 %v372, %v391
    %395 = vrot.lane.b32.xlu0 %v353, 32
    %v396 = vpop.permute.xlu0 %395
    %399 = vrot.lane.b32.xlu0 %v393, 64
    %v400 = vpop.permute.xlu0 %399
    %v402 = vsel %vm259, %v396, %v400
    %v404 = vrot.slane %v402, 2
    %v405 = vsel %vm131, %v404, 0
    %407 = vmatpush.msra.mxu0 0.0
    %408 = vmatpush.msra.mxu0 0.0
    %409 = vmatpush.msra.mxu0 0.0
    %410 = vmatpush.msra.mxu0 0.0
    %411 = vmatpush.msra.mxu0 0.0
    %412 = vmatpush.msra.mxu0 0.0
    %413 = vmatpush.msra.mxu0 0.0
    %414 = vmatpush.msra.mxu0 0.0
    %415 = vmatpush.msra.mxu0 %v126
    %416 = vmatpush.msra.mxu0 %v124
    %417 = vmatpush.msra.mxu0 %v122
    %418 = vmatpush.msra.mxu0 %v120
    %419 = vmatpush.msra.mxu0 %v118
    %420 = vmatpush.msra.mxu0 %v116
    %421 = vmatpush.msra.mxu0 %v114
    %422 = vmatpush.msra.mxu0 %v112
    %423 = vmatmul.f32.gmra.mxu0 %v405
    %v424 = vpop.f32.mrf.mxu0
    %v425 = vadd.f32 0.0, %v424
    %426 = vdwg.mxu0
    %427 = vmatpush.msra.mxu0 0.0
    %428 = vmatpush.msra.mxu0 0.0
    %429 = vmatpush.msra.mxu0 0.0
    %430 = vmatpush.msra.mxu0 0.0
    %431 = vmatpush.msra.mxu0 0.0
    %432 = vmatpush.msra.mxu0 0.0
    %433 = vmatpush.msra.mxu0 0.0
    %434 = vmatpush.msra.mxu0 0.0
    %435 = vmatpush.msra.mxu0 %v127
    %436 = vmatpush.msra.mxu0 %v125
    %437 = vmatpush.msra.mxu0 %v123
    %438 = vmatpush.msra.mxu0 %v121
    %439 = vmatpush.msra.mxu0 %v119
    %440 = vmatpush.msra.mxu0 %v117
    %441 = vmatpush.msra.mxu0 %v115
    %442 = vmatpush.msra.mxu0 %v113
    %443 = vmatmul.f32.gmra.mxu0 %v405
    %v444 = vpop.f32.mrf.mxu0
    %v445 = vadd.f32 0.0, %v444
    %446 = vdwg.mxu0
    %v449 = vrot.slane %v425, 4
    %v450 = vrot.slane %v445, 4
    %v453 = vadd.f32 %v78, %v449
    %v454 = vadd.f32 %v129, %v450
    %v455 = vxor.u32 %v453, 2147483648
    %v456 = vmul.f32 %v455, 1.442695
    %v457 = vpow.pop %v456
    %v458 = vadd.f32 %v457, 1.0
    %v459 = vrcp.pop %v458
    %v460 = vmul.f32 %v458, %v459
    %v461 = vsub.f32 1.0, %v460
    %v462 = vmul.f32 %v459, %v461
    %v463 = vadd.f32 %v459, %v462
    %vm464 = vweird.f32 %v458
    %vm465 = vweird.f32 %v459
    %vm466 = vmor %vm464, %vm465
    %v467 = vsel %vm466, %v459, %v463
    %v468 = vand.u32 2147483647, %v458
    %vm469 = vcmp.eq.f32.partialorder %v468, 8.507059e+37
    %v470 = vand.u32 %v458, 2147483648
    %v471 = vor.u32 1.1754944e-38, %v470
    %v472 = vsel %vm469, %v471, %v467
    %v473 = vmul.f32 1.0, %v472
    %v474 = vtanh.pop %v453
    %v476 = vrot.slane %v347, 6
    %v478 = vmul.f32 %v473, %v476
    %480 = vrot.lane.b32.xlu0 %v474, 64
    %v481 = vpop.permute.xlu0 %480
    %v483 = vmul.f32 %v473, %v481
    %485 = vrot.lane.b32.xlu0 %v483, 32
    %v486 = vpop.permute.xlu0 %485
    %v488 = vadd.f32 %v478, %v486
    %v489 = vtanh.pop %v488
    %491 = vrot.lane.b32.xlu0 %v489, 64
    %v492 = vpop.permute.xlu0 %491
    %v494 = vmul.f32 %v473, %v492
    %v495 = vxor.u32 %v454, 2147483648
    %v496 = vmul.f32 %v495, 1.442695
    %v497 = vpow.pop %v496
    %v498 = vadd.f32 %v497, 1.0
    %v499 = vrcp.pop %v498
    %v500 = vmul.f32 %v498, %v499
    %v501 = vsub.f32 1.0, %v500
    %v502 = vmul.f32 %v499, %v501
    %v503 = vadd.f32 %v499, %v502
    %vm504 = vweird.f32 %v498
    %vm505 = vweird.f32 %v499
    %vm506 = vmor %vm504, %vm505
    %v507 = vsel %vm506, %v499, %v503
    %v508 = vand.u32 2147483647, %v498
    %vm509 = vcmp.eq.f32.partialorder %v508, 8.507059e+37
    %v510 = vand.u32 %v498, 2147483648
    %v511 = vor.u32 1.1754944e-38, %v510
    %v512 = vsel %vm509, %v511, %v507
    %v513 = vmul.f32 1.0, %v512
    %v514 = vtanh.pop %v454
    %v516 = vrot.slane %v387, 6
    %v518 = vmul.f32 %v513, %v516
    %520 = vrot.lane.b32.xlu0 %v514, 64
    %v521 = vpop.permute.xlu0 %520
    %v523 = vmul.f32 %v513, %v521
    %525 = vrot.lane.b32.xlu0 %v523, 32
    %v526 = vpop.permute.xlu0 %525
    %v528 = vadd.f32 %v518, %v526
    %v529 = vtanh.pop %v528
    %531 = vrot.lane.b32.xlu0 %v529, 64
    %v532 = vpop.permute.xlu0 %531
    %v534 = vmul.f32 %v513, %v532
    %536 = vrot.lane.b32.xlu0 %v494, 32
    %v537 = vpop.permute.xlu0 %536
    %540 = vrot.lane.b32.xlu0 %v534, 64
    %v541 = vpop.permute.xlu0 %540
    %v543 = vsel %vm259, %v537, %v541
    %v545 = vrot.slane %v543, 4
    %v546 = vsel %vm131, %v545, 0
    %548 = vmatpush.msra.mxu0 0.0
    %549 = vmatpush.msra.mxu0 0.0
    %550 = vmatpush.msra.mxu0 0.0
    %551 = vmatpush.msra.mxu0 0.0
    %552 = vmatpush.msra.mxu0 0.0
    %553 = vmatpush.msra.mxu0 0.0
    %554 = vmatpush.msra.mxu0 0.0
    %555 = vmatpush.msra.mxu0 0.0
    %556 = vmatpush.msra.mxu0 %v126
    %557 = vmatpush.msra.mxu0 %v124
    %558 = vmatpush.msra.mxu0 %v122
    %559 = vmatpush.msra.mxu0 %v120
    %560 = vmatpush.msra.mxu0 %v118
    %561 = vmatpush.msra.mxu0 %v116
    %562 = vmatpush.msra.mxu0 %v114
    %563 = vmatpush.msra.mxu0 %v112
    %564 = vmatmul.f32.gmra.mxu0 %v546
    %v565 = vpop.f32.mrf.mxu0
    %v566 = vadd.f32 0.0, %v565
    %567 = vdwg.mxu0
    %568 = vmatpush.msra.mxu0 0.0
    %569 = vmatpush.msra.mxu0 0.0
    %570 = vmatpush.msra.mxu0 0.0
    %571 = vmatpush.msra.mxu0 0.0
    %572 = vmatpush.msra.mxu0 0.0
    %573 = vmatpush.msra.mxu0 0.0
    %574 = vmatpush.msra.mxu0 0.0
    %575 = vmatpush.msra.mxu0 0.0
    %576 = vmatpush.msra.mxu0 %v127
    %577 = vmatpush.msra.mxu0 %v125
    %578 = vmatpush.msra.mxu0 %v123
    %579 = vmatpush.msra.mxu0 %v121
    %580 = vmatpush.msra.mxu0 %v119
    %581 = vmatpush.msra.mxu0 %v117
    %582 = vmatpush.msra.mxu0 %v115
    %583 = vmatpush.msra.mxu0 %v113
    %584 = vmatmul.f32.gmra.mxu0 %v546
    %v585 = vpop.f32.mrf.mxu0
    %v586 = vadd.f32 0.0, %v585
    %587 = vdwg.mxu0
    %v590 = vrot.slane %v566, 2
    %v591 = vrot.slane %v586, 2
    %v594 = vadd.f32 %v78, %v590
    %v595 = vadd.f32 %v261, %v591
    %v596 = vxor.u32 %v594, 2147483648
    %v597 = vmul.f32 %v596, 1.442695
    %v598 = vpow.pop %v597
    %v599 = vadd.f32 %v598, 1.0
    %v600 = vrcp.pop %v599
    %v601 = vmul.f32 %v599, %v600
    %v602 = vsub.f32 1.0, %v601
    %v603 = vmul.f32 %v600, %v602
    %v604 = vadd.f32 %v600, %v603
    %vm605 = vweird.f32 %v599
    %vm606 = vweird.f32 %v600
    %vm607 = vmor %vm605, %vm606
    %v608 = vsel %vm607, %v600, %v604
    %v609 = vand.u32 2147483647, %v599
    %vm610 = vcmp.eq.f32.partialorder %v609, 8.507059e+37
    %v611 = vand.u32 %v599, 2147483648
    %v612 = vor.u32 1.1754944e-38, %v611
    %v613 = vsel %vm610, %v612, %v608
    %v614 = vmul.f32 1.0, %v613
    %v615 = vtanh.pop %v594
    %v617 = vrot.slane %v488, 6
    %v619 = vmul.f32 %v614, %v617
    %621 = vrot.lane.b32.xlu0 %v615, 64
    %v622 = vpop.permute.xlu0 %621
    %v624 = vmul.f32 %v614, %v622
    %626 = vrot.lane.b32.xlu0 %v624, 32
    %v627 = vpop.permute.xlu0 %626
    %v629 = vadd.f32 %v619, %v627
    %v630 = vtanh.pop %v629
    %632 = vrot.lane.b32.xlu0 %v630, 64
    %v633 = vpop.permute.xlu0 %632
    %v635 = vmul.f32 %v614, %v633
    %v636 = vxor.u32 %v595, 2147483648
    %v637 = vmul.f32 %v636, 1.442695
    %v638 = vpow.pop %v637
    %v639 = vadd.f32 %v638, 1.0
    %v640 = vrcp.pop %v639
    %v641 = vmul.f32 %v639, %v640
    %v642 = vsub.f32 1.0, %v641
    %v643 = vmul.f32 %v640, %v642
    %v644 = vadd.f32 %v640, %v643
    %vm645 = vweird.f32 %v639
    %vm646 = vweird.f32 %v640
    %vm647 = vmor %vm645, %vm646
    %v648 = vsel %vm647, %v640, %v644
    %v649 = vand.u32 2147483647, %v639
    %vm650 = vcmp.eq.f32.partialorder %v649, 8.507059e+37
    %v651 = vand.u32 %v639, 2147483648
    %v652 = vor.u32 1.1754944e-38, %v651
    %v653 = vsel %vm650, %v652, %v648
    %v654 = vmul.f32 1.0, %v653
    %v655 = vtanh.pop %v595
    %v657 = vrot.slane %v528, 6
    %v659 = vmul.f32 %v654, %v657
    %661 = vrot.lane.b32.xlu0 %v655, 64
    %v662 = vpop.permute.xlu0 %661
    %v664 = vmul.f32 %v654, %v662
    %666 = vrot.lane.b32.xlu0 %v664, 32
    %v667 = vpop.permute.xlu0 %666
    %v669 = vadd.f32 %v659, %v667
    %v670 = vtanh.pop %v669
    %672 = vrot.lane.b32.xlu0 %v670, 64
    %v673 = vpop.permute.xlu0 %672
    %v675 = vmul.f32 %v654, %v673
    %677 = vrot.lane.b32.xlu0 %v635, 32
    %v678 = vpop.permute.xlu0 %677
    %681 = vrot.lane.b32.xlu0 %v675, 64
    %v682 = vpop.permute.xlu0 %681
    %v684 = vsel %vm259, %v678, %v682
    %v686 = vrot.slane %v107, 6
    %v689 = vrot.slane %v684, 6
    %v690 = vsel %vm131, %v689, 0
    %692 = vmatpush.msra.mxu0 0.0
    %693 = vmatpush.msra.mxu0 0.0
    %694 = vmatpush.msra.mxu0 0.0
    %695 = vmatpush.msra.mxu0 0.0
    %696 = vmatpush.msra.mxu0 0.0
    %697 = vmatpush.msra.mxu0 0.0
    %698 = vmatpush.msra.mxu0 0.0
    %699 = vmatpush.msra.mxu0 0.0
    %700 = vmatpush.msra.mxu0 %v126
    %701 = vmatpush.msra.mxu0 %v124
    %702 = vmatpush.msra.mxu0 %v122
    %703 = vmatpush.msra.mxu0 %v120
    %704 = vmatpush.msra.mxu0 %v118
    %705 = vmatpush.msra.mxu0 %v116
    %706 = vmatpush.msra.mxu0 %v114
    %707 = vmatpush.msra.mxu0 %v112
    %708 = vmatmul.f32.gmra.mxu0 %v690
    %v709 = vpop.f32.mrf.mxu0
    %v710 = vadd.f32 0.0, %v709
    %711 = vdwg.mxu0
    %712 = vmatpush.msra.mxu0 0.0
    %713 = vmatpush.msra.mxu0 0.0
    %714 = vmatpush.msra.mxu0 0.0
    %715 = vmatpush.msra.mxu0 0.0
    %716 = vmatpush.msra.mxu0 0.0
    %717 = vmatpush.msra.mxu0 0.0
    %718 = vmatpush.msra.mxu0 0.0
    %719 = vmatpush.msra.mxu0 0.0
    %720 = vmatpush.msra.mxu0 %v127
    %721 = vmatpush.msra.mxu0 %v125
    %722 = vmatpush.msra.mxu0 %v123
    %723 = vmatpush.msra.mxu0 %v121
    %724 = vmatpush.msra.mxu0 %v119
    %725 = vmatpush.msra.mxu0 %v117
    %726 = vmatpush.msra.mxu0 %v115
    %727 = vmatpush.msra.mxu0 %v113
    %728 = vmatmul.f32.gmra.mxu0 %v690
    %v729 = vpop.f32.mrf.mxu0
    %v730 = vadd.f32 0.0, %v729
    %731 = vdwg.mxu0
    %v732 = vadd.f32 %v81, %v710
    %v733 = vadd.f32 %v686, %v730
    %v734 = vxor.u32 %v732, 2147483648
    %v735 = vmul.f32 %v734, 1.442695
    %v736 = vpow.pop %v735
    %v737 = vadd.f32 %v736, 1.0
    %v738 = vrcp.pop %v737
    %v739 = vmul.f32 %v737, %v738
    %v740 = vsub.f32 1.0, %v739
    %v741 = vmul.f32 %v738, %v740
    %v742 = vadd.f32 %v738, %v741
    %vm743 = vweird.f32 %v737
    %vm744 = vweird.f32 %v738
    %vm745 = vmor %vm743, %vm744
    %v746 = vsel %vm745, %v738, %v742
    %v747 = vand.u32 2147483647, %v737
    %vm748 = vcmp.eq.f32.partialorder %v747, 8.507059e+37
    %v749 = vand.u32 %v737, 2147483648
    %v750 = vor.u32 1.1754944e-38, %v749
    %v751 = vsel %vm748, %v750, %v746
    %v752 = vmul.f32 1.0, %v751
    %v753 = vtanh.pop %v732
    %v755 = vrot.slane %v629, 6
    %v757 = vmul.f32 %v752, %v755
    %759 = vrot.lane.b32.xlu0 %v753, 64
    %v760 = vpop.permute.xlu0 %759
    %v762 = vmul.f32 %v752, %v760
    %764 = vrot.lane.b32.xlu0 %v762, 32
    %v765 = vpop.permute.xlu0 %764
    %v767 = vadd.f32 %v757, %v765
    %v768 = vtanh.pop %v767
    %770 = vrot.lane.b32.xlu0 %v768, 64
    %v771 = vpop.permute.xlu0 %770
    %v773 = vmul.f32 %v752, %v771
    %v774 = vxor.u32 %v733, 2147483648
    %v775 = vmul.f32 %v774, 1.442695
    %v776 = vpow.pop %v775
    %v777 = vadd.f32 %v776, 1.0
    %v778 = vrcp.pop %v777
    %v779 = vmul.f32 %v777, %v778
    %v780 = vsub.f32 1.0, %v779
    %v781 = vmul.f32 %v778, %v780
    %v782 = vadd.f32 %v778, %v781
    %vm783 = vweird.f32 %v777
    %vm784 = vweird.f32 %v778
    %vm785 = vmor %vm783, %vm784
    %v786 = vsel %vm785, %v778, %v782
    %v787 = vand.u32 2147483647, %v777
    %vm788 = vcmp.eq.f32.partialorder %v787, 8.507059e+37
    %v789 = vand.u32 %v777, 2147483648
    %v790 = vor.u32 1.1754944e-38, %v789
    %v791 = vsel %vm788, %v790, %v786
    %v792 = vmul.f32 1.0, %v791
    %v793 = vtanh.pop %v733
    %v795 = vrot.slane %v669, 6
    %v797 = vmul.f32 %v792, %v795
    %799 = vrot.lane.b32.xlu0 %v793, 64
    %v800 = vpop.permute.xlu0 %799
    %v802 = vmul.f32 %v792, %v800
    %804 = vrot.lane.b32.xlu0 %v802, 32
    %v805 = vpop.permute.xlu0 %804
    %v807 = vadd.f32 %v797, %v805
    %v808 = vtanh.pop %v807
    %810 = vrot.lane.b32.xlu0 %v808, 64
    %v811 = vpop.permute.xlu0 %810
    %v813 = vmul.f32 %v792, %v811
    %815 = vrot.lane.b32.xlu0 %v773, 32
    %v816 = vpop.permute.xlu0 %815
    %819 = vrot.lane.b32.xlu0 %v813, 64
    %v820 = vpop.permute.xlu0 %819
    %v822 = vsel %vm259, %v816, %v820
    %v823 = vrot.slane %v107, 2
    %v826 = vsel %vm131, %v822, 0
    %828 = vmatpush.msra.mxu0 0.0
    %829 = vmatpush.msra.mxu0 0.0
    %830 = vmatpush.msra.mxu0 0.0
    %831 = vmatpush.msra.mxu0 0.0
    %832 = vmatpush.msra.mxu0 0.0
    %833 = vmatpush.msra.mxu0 0.0
    %834 = vmatpush.msra.mxu0 0.0
    %835 = vmatpush.msra.mxu0 0.0
    %836 = vmatpush.msra.mxu0 %v126
    %837 = vmatpush.msra.mxu0 %v124
    %838 = vmatpush.msra.mxu0 %v122
    %839 = vmatpush.msra.mxu0 %v120
    %840 = vmatpush.msra.mxu0 %v118
    %841 = vmatpush.msra.mxu0 %v116
    %842 = vmatpush.msra.mxu0 %v114
    %843 = vmatpush.msra.mxu0 %v112
    %844 = vmatmul.f32.gmra.mxu0 %v826
    %v845 = vpop.f32.mrf.mxu0
    %v846 = vadd.f32 0.0, %v845
    %847 = vdwg.mxu0
    %848 = vmatpush.msra.mxu0 0.0
    %849 = vmatpush.msra.mxu0 0.0
    %850 = vmatpush.msra.mxu0 0.0
    %851 = vmatpush.msra.mxu0 0.0
    %852 = vmatpush.msra.mxu0 0.0
    %853 = vmatpush.msra.mxu0 0.0
    %854 = vmatpush.msra.mxu0 0.0
    %855 = vmatpush.msra.mxu0 0.0
    %856 = vmatpush.msra.mxu0 %v127
    %857 = vmatpush.msra.mxu0 %v125
    %858 = vmatpush.msra.mxu0 %v123
    %859 = vmatpush.msra.mxu0 %v121
    %860 = vmatpush.msra.mxu0 %v119
    %861 = vmatpush.msra.mxu0 %v117
    %862 = vmatpush.msra.mxu0 %v115
    %863 = vmatpush.msra.mxu0 %v113
    %864 = vmatmul.f32.gmra.mxu0 %v826
    %v865 = vpop.f32.mrf.mxu0
    %v866 = vadd.f32 0.0, %v865
    %867 = vdwg.mxu0
    %v870 = vrot.slane %v846, 6
    %v871 = vrot.slane %v866, 6
    %v874 = vadd.f32 %v81, %v870
    %v875 = vadd.f32 %v823, %v871
    %v876 = vxor.u32 %v874, 2147483648
    %v877 = vmul.f32 %v876, 1.442695
    %v878 = vpow.pop %v877
    %v879 = vadd.f32 %v878, 1.0
    %v880 = vrcp.pop %v879
    %v881 = vmul.f32 %v879, %v880
    %v882 = vsub.f32 1.0, %v881
    %v883 = vmul.f32 %v880, %v882
    %v884 = vadd.f32 %v880, %v883
    %vm885 = vweird.f32 %v879
    %vm886 = vweird.f32 %v880
    %vm887 = vmor %vm885, %vm886
    %v888 = vsel %vm887, %v880, %v884
    %v889 = vand.u32 2147483647, %v879
    %vm890 = vcmp.eq.f32.partialorder %v889, 8.507059e+37
    %v891 = vand.u32 %v879, 2147483648
    %v892 = vor.u32 1.1754944e-38, %v891
    %v893 = vsel %vm890, %v892, %v888
    %v894 = vmul.f32 1.0, %v893
    %v895 = vtanh.pop %v874
    %v897 = vrot.slane %v767, 6
    %v899 = vmul.f32 %v894, %v897
    %901 = vrot.lane.b32.xlu0 %v895, 64
    %v902 = vpop.permute.xlu0 %901
    %v904 = vmul.f32 %v894, %v902
    %906 = vrot.lane.b32.xlu0 %v904, 32
    %v907 = vpop.permute.xlu0 %906
    %v909 = vadd.f32 %v899, %v907
    %v910 = vtanh.pop %v909
    %912 = vrot.lane.b32.xlu0 %v910, 64
    %v913 = vpop.permute.xlu0 %912
    %v915 = vmul.f32 %v894, %v913
    %v916 = vxor.u32 %v875, 2147483648
    %v917 = vmul.f32 %v916, 1.442695
    %v918 = vpow.pop %v917
    %v919 = vadd.f32 %v918, 1.0
    %v920 = vrcp.pop %v919
    %v921 = vmul.f32 %v919, %v920
    %v922 = vsub.f32 1.0, %v921
    %v923 = vmul.f32 %v920, %v922
    %v924 = vadd.f32 %v920, %v923
    %vm925 = vweird.f32 %v919
    %vm926 = vweird.f32 %v920
    %vm927 = vmor %vm925, %vm926
    %v928 = vsel %vm927, %v920, %v924
    %v929 = vand.u32 2147483647, %v919
    %vm930 = vcmp.eq.f32.partialorder %v929, 8.507059e+37
    %v931 = vand.u32 %v919, 2147483648
    %v932 = vor.u32 1.1754944e-38, %v931
    %v933 = vsel %vm930, %v932, %v928
    %v934 = vmul.f32 1.0, %v933
    %v935 = vtanh.pop %v875
    %v937 = vrot.slane %v807, 6
    %v939 = vmul.f32 %v934, %v937
    %941 = vrot.lane.b32.xlu0 %v935, 64
    %v942 = vpop.permute.xlu0 %941
    %v944 = vmul.f32 %v934, %v942
    %946 = vrot.lane.b32.xlu0 %v944, 32
    %v947 = vpop.permute.xlu0 %946
    %v949 = vadd.f32 %v939, %v947
    %v950 = vtanh.pop %v949
    %952 = vrot.lane.b32.xlu0 %v950, 64
    %v953 = vpop.permute.xlu0 %952
    %v955 = vmul.f32 %v934, %v953
    %957 = vrot.lane.b32.xlu0 %v915, 32
    %v958 = vpop.permute.xlu0 %957
    %961 = vrot.lane.b32.xlu0 %v955, 64
    %v962 = vpop.permute.xlu0 %961
    %v964 = vsel %vm259, %v958, %v962
    %v966 = vrot.slane %v964, 2
    %v967 = vsel %vm131, %v966, 0
    %969 = vmatpush.msra.mxu0 0.0
    %970 = vmatpush.msra.mxu0 0.0
    %971 = vmatpush.msra.mxu0 0.0
    %972 = vmatpush.msra.mxu0 0.0
    %973 = vmatpush.msra.mxu0 0.0
    %974 = vmatpush.msra.mxu0 0.0
    %975 = vmatpush.msra.mxu0 0.0
    %976 = vmatpush.msra.mxu0 0.0
    %977 = vmatpush.msra.mxu0 %v126
    %978 = vmatpush.msra.mxu0 %v124
    %979 = vmatpush.msra.mxu0 %v122
    %980 = vmatpush.msra.mxu0 %v120
    %981 = vmatpush.msra.mxu0 %v118
    %982 = vmatpush.msra.mxu0 %v116
    %983 = vmatpush.msra.mxu0 %v114
    %984 = vmatpush.msra.mxu0 %v112
    %985 = vmatmul.f32.gmra.mxu0 %v967
    %v986 = vpop.f32.mrf.mxu0
    %v987 = vadd.f32 0.0, %v986
    %988 = vdwg.mxu0
    %989 = vmatpush.msra.mxu0 0.0
    %990 = vmatpush.msra.mxu0 0.0
    %991 = vmatpush.msra.mxu0 0.0
    %992 = vmatpush.msra.mxu0 0.0
    %993 = vmatpush.msra.mxu0 0.0
    %994 = vmatpush.msra.mxu0 0.0
    %995 = vmatpush.msra.mxu0 0.0
    %996 = vmatpush.msra.mxu0 0.0
    %997 = vmatpush.msra.mxu0 %v127
    %998 = vmatpush.msra.mxu0 %v125
    %999 = vmatpush.msra.mxu0 %v123
    %1000 = vmatpush.msra.mxu0 %v121
    %1001 = vmatpush.msra.mxu0 %v119
    %1002 = vmatpush.msra.mxu0 %v117
    %1003 = vmatpush.msra.mxu0 %v115
    %1004 = vmatpush.msra.mxu0 %v113
    %1005 = vmatmul.f32.gmra.mxu0 %v967
    %v1006 = vpop.f32.mrf.mxu0
    %v1007 = vadd.f32 0.0, %v1006
    %1008 = vdwg.mxu0
    %v1011 = vrot.slane %v987, 4
    %v1012 = vrot.slane %v1007, 4
    %v1015 = vadd.f32 %v81, %v1011
    %v1016 = vadd.f32 %v686, %v1012
    %v1017 = vxor.u32 %v1015, 2147483648
    %v1018 = vmul.f32 %v1017, 1.442695
    %v1019 = vpow.pop %v1018
    %v1020 = vadd.f32 %v1019, 1.0
    %v1021 = vrcp.pop %v1020
    %v1022 = vmul.f32 %v1020, %v1021
    %v1023 = vsub.f32 1.0, %v1022
    %v1024 = vmul.f32 %v1021, %v1023
    %v1025 = vadd.f32 %v1021, %v1024
    %vm1026 = vweird.f32 %v1020
    %vm1027 = vweird.f32 %v1021
    %vm1028 = vmor %vm1026, %vm1027
    %v1029 = vsel %vm1028, %v1021, %v1025
    %v1030 = vand.u32 2147483647, %v1020
    %vm1031 = vcmp.eq.f32.partialorder %v1030, 8.507059e+37
    %v1032 = vand.u32 %v1020, 2147483648
    %v1033 = vor.u32 1.1754944e-38, %v1032
    %v1034 = vsel %vm1031, %v1033, %v1029
    %v1035 = vmul.f32 1.0, %v1034
    %v1036 = vtanh.pop %v1015
    %v1038 = vrot.slane %v909, 6
    %v1040 = vmul.f32 %v1035, %v1038
    %1042 = vrot.lane.b32.xlu0 %v1036, 64
    %v1043 = vpop.permute.xlu0 %1042
    %v1045 = vmul.f32 %v1035, %v1043
    %1047 = vrot.lane.b32.xlu0 %v1045, 32
    %v1048 = vpop.permute.xlu0 %1047
    %v1050 = vadd.f32 %v1040, %v1048
    %v1051 = vtanh.pop %v1050
    %1053 = vrot.lane.b32.xlu0 %v1051, 64
    %v1054 = vpop.permute.xlu0 %1053
    %v1056 = vmul.f32 %v1035, %v1054
    %v1057 = vxor.u32 %v1016, 2147483648
    %v1058 = vmul.f32 %v1057, 1.442695
    %v1059 = vpow.pop %v1058
    %v1060 = vadd.f32 %v1059, 1.0
    %v1061 = vrcp.pop %v1060
    %v1062 = vmul.f32 %v1060, %v1061
    %v1063 = vsub.f32 1.0, %v1062
    %v1064 = vmul.f32 %v1061, %v1063
    %v1065 = vadd.f32 %v1061, %v1064
    %vm1066 = vweird.f32 %v1060
    %vm1067 = vweird.f32 %v1061
    %vm1068 = vmor %vm1066, %vm1067
    %v1069 = vsel %vm1068, %v1061, %v1065
    %v1070 = vand.u32 2147483647, %v1060
    %vm1071 = vcmp.eq.f32.partialorder %v1070, 8.507059e+37
    %v1072 = vand.u32 %v1060, 2147483648
    %v1073 = vor.u32 1.1754944e-38, %v1072
    %v1074 = vsel %vm1071, %v1073, %v1069
    %v1075 = vmul.f32 1.0, %v1074
    %v1076 = vtanh.pop %v1016
    %v1078 = vrot.slane %v949, 6
    %v1080 = vmul.f32 %v1075, %v1078
    %1082 = vrot.lane.b32.xlu0 %v1076, 64
    %v1083 = vpop.permute.xlu0 %1082
    %v1085 = vmul.f32 %v1075, %v1083
    %1087 = vrot.lane.b32.xlu0 %v1085, 32
    %v1088 = vpop.permute.xlu0 %1087
    %v1090 = vadd.f32 %v1080, %v1088
    %v1091 = vtanh.pop %v1090
    %1093 = vrot.lane.b32.xlu0 %v1091, 64
    %v1094 = vpop.permute.xlu0 %1093
    %v1096 = vmul.f32 %v1075, %v1094
    %1098 = vrot.lane.b32.xlu0 %v1056, 32
    %v1099 = vpop.permute.xlu0 %1098
    %1102 = vrot.lane.b32.xlu0 %v1096, 64
    %v1103 = vpop.permute.xlu0 %1102
    %v1105 = vsel %vm259, %v1099, %v1103
    %v1107 = vrot.slane %v1105, 4
    %v1108 = vsel %vm131, %v1107, 0
    %1110 = vmatpush.msra.mxu0 0.0
    %1111 = vmatpush.msra.mxu0 0.0
    %1112 = vmatpush.msra.mxu0 0.0
    %1113 = vmatpush.msra.mxu0 0.0
    %1114 = vmatpush.msra.mxu0 0.0
    %1115 = vmatpush.msra.mxu0 0.0
    %1116 = vmatpush.msra.mxu0 0.0
    %1117 = vmatpush.msra.mxu0 0.0
    %1118 = vmatpush.msra.mxu0 %v126
    %1119 = vmatpush.msra.mxu0 %v124
    %1120 = vmatpush.msra.mxu0 %v122
    %1121 = vmatpush.msra.mxu0 %v120
    %1122 = vmatpush.msra.mxu0 %v118
    %1123 = vmatpush.msra.mxu0 %v116
    %1124 = vmatpush.msra.mxu0 %v114
    %1125 = vmatpush.msra.mxu0 %v112
    %1126 = vmatmul.f32.gmra.mxu0 %v1108
    %v1127 = vpop.f32.mrf.mxu0
    %v1128 = vadd.f32 0.0, %v1127
    %1129 = vdwg.mxu0
    %1130 = vmatpush.msra.mxu0 0.0
    %1131 = vmatpush.msra.mxu0 0.0
    %1132 = vmatpush.msra.mxu0 0.0
    %1133 = vmatpush.msra.mxu0 0.0
    %1134 = vmatpush.msra.mxu0 0.0
    %1135 = vmatpush.msra.mxu0 0.0
    %1136 = vmatpush.msra.mxu0 0.0
    %1137 = vmatpush.msra.mxu0 0.0
    %1138 = vmatpush.msra.mxu0 %v127
    %1139 = vmatpush.msra.mxu0 %v125
    %1140 = vmatpush.msra.mxu0 %v123
    %1141 = vmatpush.msra.mxu0 %v121
    %1142 = vmatpush.msra.mxu0 %v119
    %1143 = vmatpush.msra.mxu0 %v117
    %1144 = vmatpush.msra.mxu0 %v115
    %1145 = vmatpush.msra.mxu0 %v113
    %1146 = vmatmul.f32.gmra.mxu0 %v1108
    %v1147 = vpop.f32.mrf.mxu0
    %v1148 = vadd.f32 0.0, %v1147
    %1149 = vdwg.mxu0
    %v1152 = vrot.slane %v1128, 2
    %v1153 = vrot.slane %v1148, 2
    %v1156 = vadd.f32 %v81, %v1152
    %v1157 = vadd.f32 %v823, %v1153
    %v1158 = vxor.u32 %v1156, 2147483648
    %v1159 = vmul.f32 %v1158, 1.442695
    %v1160 = vpow.pop %v1159
    %v1161 = vadd.f32 %v1160, 1.0
    %v1162 = vrcp.pop %v1161
    %v1163 = vmul.f32 %v1161, %v1162
    %v1164 = vsub.f32 1.0, %v1163
    %v1165 = vmul.f32 %v1162, %v1164
    %v1166 = vadd.f32 %v1162, %v1165
    %vm1167 = vweird.f32 %v1161
    %vm1168 = vweird.f32 %v1162
    %vm1169 = vmor %vm1167, %vm1168
    %v1170 = vsel %vm1169, %v1162, %v1166
    %v1171 = vand.u32 2147483647, %v1161
    %vm1172 = vcmp.eq.f32.partialorder %v1171, 8.507059e+37
    %v1173 = vand.u32 %v1161, 2147483648
    %v1174 = vor.u32 1.1754944e-38, %v1173
    %v1175 = vsel %vm1172, %v1174, %v1170
    %v1176 = vmul.f32 1.0, %v1175
    %v1177 = vtanh.pop %v1156
    %v1179 = vrot.slane %v1050, 6
    %v1181 = vmul.f32 %v1176, %v1179
    %1183 = vrot.lane.b32.xlu0 %v1177, 64
    %v1184 = vpop.permute.xlu0 %1183
    %v1186 = vmul.f32 %v1176, %v1184
    %1188 = vrot.lane.b32.xlu0 %v1186, 32
    %v1189 = vpop.permute.xlu0 %1188
    %v1191 = vadd.f32 %v1181, %v1189
    %v1192 = vtanh.pop %v1191
    %1194 = vrot.lane.b32.xlu0 %v1192, 64
    %v1195 = vpop.permute.xlu0 %1194
    %v1197 = vmul.f32 %v1176, %v1195
    %v1198 = vxor.u32 %v1157, 2147483648
    %v1199 = vmul.f32 %v1198, 1.442695
    %v1200 = vpow.pop %v1199
    %v1201 = vadd.f32 %v1200, 1.0
    %v1202 = vrcp.pop %v1201
    %v1203 = vmul.f32 %v1201, %v1202
    %v1204 = vsub.f32 1.0, %v1203
    %v1205 = vmul.f32 %v1202, %v1204
    %v1206 = vadd.f32 %v1202, %v1205
    %vm1207 = vweird.f32 %v1201
    %vm1208 = vweird.f32 %v1202
    %vm1209 = vmor %vm1207, %vm1208
    %v1210 = vsel %vm1209, %v1202, %v1206
    %v1211 = vand.u32 2147483647, %v1201
    %vm1212 = vcmp.eq.f32.partialorder %v1211, 8.507059e+37
    %v1213 = vand.u32 %v1201, 2147483648
    %v1214 = vor.u32 1.1754944e-38, %v1213
    %v1215 = vsel %vm1212, %v1214, %v1210
    %v1216 = vmul.f32 1.0, %v1215
    %v1217 = vtanh.pop %v1157
    %v1219 = vrot.slane %v1090, 6
    %v1221 = vmul.f32 %v1216, %v1219
    %1223 = vrot.lane.b32.xlu0 %v1217, 64
    %v1224 = vpop.permute.xlu0 %1223
    %v1226 = vmul.f32 %v1216, %v1224
    %1228 = vrot.lane.b32.xlu0 %v1226, 32
    %v1229 = vpop.permute.xlu0 %1228
    %v1231 = vadd.f32 %v1221, %v1229
    %v1232 = vtanh.pop %v1231
    %1234 = vrot.lane.b32.xlu0 %v1232, 64
    %v1235 = vpop.permute.xlu0 %1234
    %v1237 = vmul.f32 %v1216, %v1235
    %v1239 = vrot.slane %v1237, 6
    %1240 = vrot.lane.b32.xlu0 %v1239, 64
    %v1241 = vpop.permute.xlu0 %1240
    %v1243 = vsel %vm259, %v253, %v1241
    %v1244 = vrot.slane %v1096, 2
    %1245 = vrot.lane.b32.xlu0 %v1244, 64
    %v1246 = vpop.permute.xlu0 %1245
    %v1248 = vsel %vm259, %v396, %v1246
    %v1249 = vrot.slane %v955, 6
    %1250 = vrot.lane.b32.xlu0 %v1249, 64
    %v1251 = vpop.permute.xlu0 %1250
    %v1253 = vsel %vm259, %v537, %v1251
    %v1254 = vrot.slane %v813, 2
    %1255 = vrot.lane.b32.xlu0 %v1254, 64
    %v1256 = vpop.permute.xlu0 %1255
    %v1258 = vsel %vm259, %v678, %v1256
    %v1259 = vrot.slane %v675, 6
    %1260 = vrot.lane.b32.xlu0 %v1259, 64
    %v1261 = vpop.permute.xlu0 %1260
    %v1263 = vsel %vm259, %v816, %v1261
    %v1264 = vrot.slane %v534, 2
    %1265 = vrot.lane.b32.xlu0 %v1264, 64
    %v1266 = vpop.permute.xlu0 %1265
    %v1268 = vsel %vm259, %v958, %v1266
    %v1269 = vrot.slane %v393, 6
    %1270 = vrot.lane.b32.xlu0 %v1269, 64
    %v1271 = vpop.permute.xlu0 %1270
    %v1273 = vsel %vm259, %v1099, %v1271
    %1275 = vrot.lane.b32.xlu0 %v1197, 32
    %v1276 = vpop.permute.xlu0 %1275
    %v1278 = vrot.slane %v250, 2
    %1279 = vrot.lane.b32.xlu0 %v1278, 64
    %v1280 = vpop.permute.xlu0 %1279
    %v1282 = vsel %vm259, %v1276, %v1280
    %vm1283 = vcmask 1041408
    %v1284 = vsel %vm1283, %v1243, %v1248
    %vm1285 = vcmask 1043456
    %v1286 = vsel %vm1285, %v1284, %v1253
    %vm1287 = vcmask 1045504
    %v1288 = vsel %vm1287, %v1286, %v1258
    %v1289 = vsel %vm1283, %v1263, %v1268
    %v1290 = vsel %vm1285, %v1289, %v1273
    %v1291 = vsel %vm1287, %v1290, %v1282
    %v1292 = vld [vmem:[%s6] sm:$0xff]
    %v1293 = vld [vmem:[%s6 + $0x8] sm:$0xff]
    %v1294 = vld [vmem:[%s6 + $0x10] sm:$0xff]
    %v1295 = vld [vmem:[%s6 + $0x18] sm:$0xff]
    %v1296 = vld [vmem:[%s6 + $0x20] sm:$0xff]
    %v1297 = vld [vmem:[%s6 + $0x28] sm:$0xff]
    %v1298 = vld [vmem:[%s6 + $0x30] sm:$0xff]
    %v1299 = vld [vmem:[%s6 + $0x38] sm:$0xff]
    %v1300 = vld [vmem:[%s8] sm:$0x1]
    %v1302 = vperm.slane %v1300, 0
    %v1305 = vsel %vm131, %v1288, 0
    %v1308 = vsel %vm131, %v1291, 0
    %1310 = vmatpush.msra.mxu0 0.0
    %1311 = vmatpush.msra.mxu0 0.0
    %1312 = vmatpush.msra.mxu0 0.0
    %1313 = vmatpush.msra.mxu0 0.0
    %1314 = vmatpush.msra.mxu0 0.0
    %1315 = vmatpush.msra.mxu0 0.0
    %1316 = vmatpush.msra.mxu0 0.0
    %1317 = vmatpush.msra.mxu0 0.0
    %1318 = vmatpush.msra.mxu0 %v1299
    %1319 = vmatpush.msra.mxu0 %v1298
    %1320 = vmatpush.msra.mxu0 %v1297
    %1321 = vmatpush.msra.mxu0 %v1296
    %1322 = vmatpush.msra.mxu0 %v1295
    %1323 = vmatpush.msra.mxu0 %v1294
    %1324 = vmatpush.msra.mxu0 %v1293
    %1325 = vmatpush.msra.mxu0 %v1292
    %1326 = vmatmul.f32.gmra.mxu0 %v1305
    %v1327 = vpop.f32.mrf.mxu0
    %v1328 = vadd.f32 %v1302, %v1327
    %1329 = vmatmul.f32.gmra.mxu0 %v1308
    %v1330 = vpop.f32.mrf.mxu0
    %v1331 = vadd.f32 %v1302, %v1330
    %1332 = vdwg.mxu0
    %v1333 = vld [vmem:[%s7] sm:$0xff]
    %v1334 = vld [vmem:[%s7 + $0x8] sm:$0xff]
    %v1335 = vld [vmem:[%s7 + $0x10] sm:$0xff]
    %v1336 = vld [vmem:[%s7 + $0x18] sm:$0xff]
    %v1337 = vsel %vm259, 0.0, 0
    %1339 = vmatpush.msra.mxu0 0.0
    %1340 = vmatpush.msra.mxu0 0.0
    %1341 = vmatpush.msra.mxu0 0.0
    %1342 = vmatpush.msra.mxu0 0.0
    %1343 = vmatpush.msra.mxu0 0.0
    %1344 = vmatpush.msra.mxu0 0.0
    %1345 = vmatpush.msra.mxu0 0.0
    %1346 = vmatpush.msra.mxu0 0.0
    %1347 = vmatpush.msra.mxu0 0.0
    %1348 = vmatpush.msra.mxu0 0.0
    %1349 = vmatpush.msra.mxu0 0.0
    %1350 = vmatpush.msra.mxu0 0.0
    %1351 = vmatpush.msra.mxu0 %v1336
    %1352 = vmatpush.msra.mxu0 %v1335
    %1353 = vmatpush.msra.mxu0 %v1334
    %1354 = vmatpush.msra.mxu0 %v1333
    %1355 = vmatmul.f32.gmra.mxu0 %v1337
    %v1356 = vpop.f32.mrf.mxu0
    %v1357 = vadd.f32 0.0, %v1356
    %1358 = vdwg.mxu0
    %v1359 = vadd.f32 %v1328, %v1357
    %v1360 = vxor.u32 %v1359, 2147483648
    %v1361 = vmul.f32 %v1360, 1.442695
    %v1362 = vpow.pop %v1361
    %v1363 = vadd.f32 %v1362, 1.0
    %v1364 = vrcp.pop %v1363
    %v1365 = vmul.f32 %v1363, %v1364
    %v1366 = vsub.f32 1.0, %v1365
    %v1367 = vmul.f32 %v1364, %v1366
    %v1368 = vadd.f32 %v1364, %v1367
    %vm1369 = vweird.f32 %v1363
    %vm1370 = vweird.f32 %v1364
    %vm1371 = vmor %vm1369, %vm1370
    %v1372 = vsel %vm1371, %v1364, %v1368
    %v1373 = vand.u32 2147483647, %v1363
    %vm1374 = vcmp.eq.f32.partialorder %v1373, 8.507059e+37
    %v1375 = vand.u32 %v1363, 2147483648
    %v1376 = vor.u32 1.1754944e-38, %v1375
    %v1377 = vsel %vm1374, %v1376, %v1372
    %v1378 = vmul.f32 1.0, %v1377
    %v1379 = vtanh.pop %v1359
    %v1380 = vmul.f32 %v1378, 0.0
    %1382 = vrot.lane.b32.xlu0 %v1379, 64
    %v1383 = vpop.permute.xlu0 %1382
    %v1385 = vmul.f32 %v1378, %v1383
    %1387 = vrot.lane.b32.xlu0 %v1385, 32
    %v1388 = vpop.permute.xlu0 %1387
    %v1390 = vadd.f32 %v1380, %v1388
    %v1391 = vtanh.pop %v1390
    %1393 = vrot.lane.b32.xlu0 %v1391, 64
    %v1394 = vpop.permute.xlu0 %1393
    %v1396 = vmul.f32 %v1378, %v1394
    %1398 = vrot.lane.b32.xlu0 %v1396, 32
    %v1399 = vpop.permute.xlu0 %1398
    %v1400 = vsel %vm259, %v1399, 0
    %1402 = vmatpush.msra.mxu0 0.0
    %1403 = vmatpush.msra.mxu0 0.0
    %1404 = vmatpush.msra.mxu0 0.0
    %1405 = vmatpush.msra.mxu0 0.0
    %1406 = vmatpush.msra.mxu0 0.0
    %1407 = vmatpush.msra.mxu0 0.0
    %1408 = vmatpush.msra.mxu0 0.0
    %1409 = vmatpush.msra.mxu0 0.0
    %1410 = vmatpush.msra.mxu0 0.0
    %1411 = vmatpush.msra.mxu0 0.0
    %1412 = vmatpush.msra.mxu0 0.0
    %1413 = vmatpush.msra.mxu0 0.0
    %1414 = vmatpush.msra.mxu0 %v1336
    %1415 = vmatpush.msra.mxu0 %v1335
    %1416 = vmatpush.msra.mxu0 %v1334
    %1417 = vmatpush.msra.mxu0 %v1333
    %1418 = vmatmul.f32.gmra.mxu0 %v1400
    %v1419 = vpop.f32.mrf.mxu0
    %v1420 = vadd.f32 0.0, %v1419
    %1421 = vdwg.mxu0
    %v1423 = vrot.slane %v1420, 6
    %v1425 = vadd.f32 %v1328, %v1423
    %v1426 = vxor.u32 %v1425, 2147483648
    %v1427 = vmul.f32 %v1426, 1.442695
    %v1428 = vpow.pop %v1427
    %v1429 = vadd.f32 %v1428, 1.0
    %v1430 = vrcp.pop %v1429
    %v1431 = vmul.f32 %v1429, %v1430
    %v1432 = vsub.f32 1.0, %v1431
    %v1433 = vmul.f32 %v1430, %v1432
    %v1434 = vadd.f32 %v1430, %v1433
    %vm1435 = vweird.f32 %v1429
    %vm1436 = vweird.f32 %v1430
    %vm1437 = vmor %vm1435, %vm1436
    %v1438 = vsel %vm1437, %v1430, %v1434
    %v1439 = vand.u32 2147483647, %v1429
    %vm1440 = vcmp.eq.f32.partialorder %v1439, 8.507059e+37
    %v1441 = vand.u32 %v1429, 2147483648
    %v1442 = vor.u32 1.1754944e-38, %v1441
    %v1443 = vsel %vm1440, %v1442, %v1438
    %v1444 = vmul.f32 1.0, %v1443
    %v1445 = vtanh.pop %v1425
    %v1447 = vrot.slane %v1390, 6
    %v1449 = vmul.f32 %v1444, %v1447
    %1451 = vrot.lane.b32.xlu0 %v1445, 64
    %v1452 = vpop.permute.xlu0 %1451
    %v1454 = vmul.f32 %v1444, %v1452
    %1456 = vrot.lane.b32.xlu0 %v1454, 32
    %v1457 = vpop.permute.xlu0 %1456
    %v1459 = vadd.f32 %v1449, %v1457
    %v1460 = vtanh.pop %v1459
    %1462 = vrot.lane.b32.xlu0 %v1460, 64
    %v1463 = vpop.permute.xlu0 %1462
    %v1465 = vmul.f32 %v1444, %v1463
    %v1467 = vrot.slane %v1465, 2
    %1468 = vrot.lane.b32.xlu0 %v1467, 32
    %v1469 = vpop.permute.xlu0 %1468
    %v1470 = vsel %vm259, %v1469, 0
    %1472 = vmatpush.msra.mxu0 0.0
    %1473 = vmatpush.msra.mxu0 0.0
    %1474 = vmatpush.msra.mxu0 0.0
    %1475 = vmatpush.msra.mxu0 0.0
    %1476 = vmatpush.msra.mxu0 0.0
    %1477 = vmatpush.msra.mxu0 0.0
    %1478 = vmatpush.msra.mxu0 0.0
    %1479 = vmatpush.msra.mxu0 0.0
    %1480 = vmatpush.msra.mxu0 0.0
    %1481 = vmatpush.msra.mxu0 0.0
    %1482 = vmatpush.msra.mxu0 0.0
    %1483 = vmatpush.msra.mxu0 0.0
    %1484 = vmatpush.msra.mxu0 %v1336
    %1485 = vmatpush.msra.mxu0 %v1335
    %1486 = vmatpush.msra.mxu0 %v1334
    %1487 = vmatpush.msra.mxu0 %v1333
    %1488 = vmatmul.f32.gmra.mxu0 %v1470
    %v1489 = vpop.f32.mrf.mxu0
    %v1490 = vadd.f32 0.0, %v1489
    %1491 = vdwg.mxu0
    %v1493 = vrot.slane %v1490, 4
    %v1495 = vadd.f32 %v1328, %v1493
    %v1496 = vxor.u32 %v1495, 2147483648
    %v1497 = vmul.f32 %v1496, 1.442695
    %v1498 = vpow.pop %v1497
    %v1499 = vadd.f32 %v1498, 1.0
    %v1500 = vrcp.pop %v1499
    %v1501 = vmul.f32 %v1499, %v1500
    %v1502 = vsub.f32 1.0, %v1501
    %v1503 = vmul.f32 %v1500, %v1502
    %v1504 = vadd.f32 %v1500, %v1503
    %vm1505 = vweird.f32 %v1499
    %vm1506 = vweird.f32 %v1500
    %vm1507 = vmor %vm1505, %vm1506
    %v1508 = vsel %vm1507, %v1500, %v1504
    %v1509 = vand.u32 2147483647, %v1499
    %vm1510 = vcmp.eq.f32.partialorder %v1509, 8.507059e+37
    %v1511 = vand.u32 %v1499, 2147483648
    %v1512 = vor.u32 1.1754944e-38, %v1511
    %v1513 = vsel %vm1510, %v1512, %v1508
    %v1514 = vmul.f32 1.0, %v1513
    %v1515 = vtanh.pop %v1495
    %v1517 = vrot.slane %v1459, 6
    %v1519 = vmul.f32 %v1514, %v1517
    %1521 = vrot.lane.b32.xlu0 %v1515, 64
    %v1522 = vpop.permute.xlu0 %1521
    %v1524 = vmul.f32 %v1514, %v1522
    %1526 = vrot.lane.b32.xlu0 %v1524, 32
    %v1527 = vpop.permute.xlu0 %1526
    %v1529 = vadd.f32 %v1519, %v1527
    %v1530 = vtanh.pop %v1529
    %1532 = vrot.lane.b32.xlu0 %v1530, 64
    %v1533 = vpop.permute.xlu0 %1532
    %v1535 = vmul.f32 %v1514, %v1533
    %v1537 = vrot.slane %v1535, 4
    %1538 = vrot.lane.b32.xlu0 %v1537, 32
    %v1539 = vpop.permute.xlu0 %1538
    %v1540 = vsel %vm259, %v1539, 0
    %1542 = vmatpush.msra.mxu0 0.0
    %1543 = vmatpush.msra.mxu0 0.0
    %1544 = vmatpush.msra.mxu0 0.0
    %1545 = vmatpush.msra.mxu0 0.0
    %1546 = vmatpush.msra.mxu0 0.0
    %1547 = vmatpush.msra.mxu0 0.0
    %1548 = vmatpush.msra.mxu0 0.0
    %1549 = vmatpush.msra.mxu0 0.0
    %1550 = vmatpush.msra.mxu0 0.0
    %1551 = vmatpush.msra.mxu0 0.0
    %1552 = vmatpush.msra.mxu0 0.0
    %1553 = vmatpush.msra.mxu0 0.0
    %1554 = vmatpush.msra.mxu0 %v1336
    %1555 = vmatpush.msra.mxu0 %v1335
    %1556 = vmatpush.msra.mxu0 %v1334
    %1557 = vmatpush.msra.mxu0 %v1333
    %1558 = vmatmul.f32.gmra.mxu0 %v1540
    %v1559 = vpop.f32.mrf.mxu0
    %v1560 = vadd.f32 0.0, %v1559
    %1561 = vdwg.mxu0
    %v1563 = vrot.slane %v1560, 2
    %v1565 = vadd.f32 %v1328, %v1563
    %v1566 = vxor.u32 %v1565, 2147483648
    %v1567 = vmul.f32 %v1566, 1.442695
    %v1568 = vpow.pop %v1567
    %v1569 = vadd.f32 %v1568, 1.0
    %v1570 = vrcp.pop %v1569
    %v1571 = vmul.f32 %v1569, %v1570
    %v1572 = vsub.f32 1.0, %v1571
    %v1573 = vmul.f32 %v1570, %v1572
    %v1574 = vadd.f32 %v1570, %v1573
    %vm1575 = vweird.f32 %v1569
    %vm1576 = vweird.f32 %v1570
    %vm1577 = vmor %vm1575, %vm1576
    %v1578 = vsel %vm1577, %v1570, %v1574
    %v1579 = vand.u32 2147483647, %v1569
    %vm1580 = vcmp.eq.f32.partialorder %v1579, 8.507059e+37
    %v1581 = vand.u32 %v1569, 2147483648
    %v1582 = vor.u32 1.1754944e-38, %v1581
    %v1583 = vsel %vm1580, %v1582, %v1578
    %v1584 = vmul.f32 1.0, %v1583
    %v1585 = vtanh.pop %v1565
    %v1587 = vrot.slane %v1529, 6
    %v1589 = vmul.f32 %v1584, %v1587
    %1591 = vrot.lane.b32.xlu0 %v1585, 64
    %v1592 = vpop.permute.xlu0 %1591
    %v1594 = vmul.f32 %v1584, %v1592
    %1596 = vrot.lane.b32.xlu0 %v1594, 32
    %v1597 = vpop.permute.xlu0 %1596
    %v1599 = vadd.f32 %v1589, %v1597
    %v1600 = vtanh.pop %v1599
    %1602 = vrot.lane.b32.xlu0 %v1600, 64
    %v1603 = vpop.permute.xlu0 %1602
    %v1605 = vmul.f32 %v1584, %v1603
    %v1607 = vrot.slane %v1605, 6
    %1608 = vrot.lane.b32.xlu0 %v1607, 32
    %v1609 = vpop.permute.xlu0 %1608
    %v1610 = vsel %vm259, %v1609, 0
    %1612 = vmatpush.msra.mxu0 0.0
    %1613 = vmatpush.msra.mxu0 0.0
    %1614 = vmatpush.msra.mxu0 0.0
    %1615 = vmatpush.msra.mxu0 0.0
    %1616 = vmatpush.msra.mxu0 0.0
    %1617 = vmatpush.msra.mxu0 0.0
    %1618 = vmatpush.msra.mxu0 0.0
    %1619 = vmatpush.msra.mxu0 0.0
    %1620 = vmatpush.msra.mxu0 0.0
    %1621 = vmatpush.msra.mxu0 0.0
    %1622 = vmatpush.msra.mxu0 0.0
    %1623 = vmatpush.msra.mxu0 0.0
    %1624 = vmatpush.msra.mxu0 %v1336
    %1625 = vmatpush.msra.mxu0 %v1335
    %1626 = vmatpush.msra.mxu0 %v1334
    %1627 = vmatpush.msra.mxu0 %v1333
    %1628 = vmatmul.f32.gmra.mxu0 %v1610
    %v1629 = vpop.f32.mrf.mxu0
    %v1630 = vadd.f32 0.0, %v1629
    %1631 = vdwg.mxu0
    %v1632 = vadd.f32 %v1331, %v1630
    %v1633 = vxor.u32 %v1632, 2147483648
    %v1634 = vmul.f32 %v1633, 1.442695
    %v1635 = vpow.pop %v1634
    %v1636 = vadd.f32 %v1635, 1.0
    %v1637 = vrcp.pop %v1636
    %v1638 = vmul.f32 %v1636, %v1637
    %v1639 = vsub.f32 1.0, %v1638
    %v1640 = vmul.f32 %v1637, %v1639
    %v1641 = vadd.f32 %v1637, %v1640
    %vm1642 = vweird.f32 %v1636
    %vm1643 = vweird.f32 %v1637
    %vm1644 = vmor %vm1642, %vm1643
    %v1645 = vsel %vm1644, %v1637, %v1641
    %v1646 = vand.u32 2147483647, %v1636
    %vm1647 = vcmp.eq.f32.partialorder %v1646, 8.507059e+37
    %v1648 = vand.u32 %v1636, 2147483648
    %v1649 = vor.u32 1.1754944e-38, %v1648
    %v1650 = vsel %vm1647, %v1649, %v1645
    %v1651 = vmul.f32 1.0, %v1650
    %v1652 = vtanh.pop %v1632
    %v1654 = vrot.slane %v1599, 6
    %v1656 = vmul.f32 %v1651, %v1654
    %1658 = vrot.lane.b32.xlu0 %v1652, 64
    %v1659 = vpop.permute.xlu0 %1658
    %v1661 = vmul.f32 %v1651, %v1659
    %1663 = vrot.lane.b32.xlu0 %v1661, 32
    %v1664 = vpop.permute.xlu0 %1663
    %v1666 = vadd.f32 %v1656, %v1664
    %v1667 = vtanh.pop %v1666
    %1669 = vrot.lane.b32.xlu0 %v1667, 64
    %v1670 = vpop.permute.xlu0 %1669
    %v1672 = vmul.f32 %v1651, %v1670
    %1674 = vrot.lane.b32.xlu0 %v1672, 32
    %v1675 = vpop.permute.xlu0 %1674
    %v1676 = vsel %vm259, %v1675, 0
    %1678 = vmatpush.msra.mxu0 0.0
    %1679 = vmatpush.msra.mxu0 0.0
    %1680 = vmatpush.msra.mxu0 0.0
    %1681 = vmatpush.msra.mxu0 0.0
    %1682 = vmatpush.msra.mxu0 0.0
    %1683 = vmatpush.msra.mxu0 0.0
    %1684 = vmatpush.msra.mxu0 0.0
    %1685 = vmatpush.msra.mxu0 0.0
    %1686 = vmatpush.msra.mxu0 0.0
    %1687 = vmatpush.msra.mxu0 0.0
    %1688 = vmatpush.msra.mxu0 0.0
    %1689 = vmatpush.msra.mxu0 0.0
    %1690 = vmatpush.msra.mxu0 %v1336
    %1691 = vmatpush.msra.mxu0 %v1335
    %1692 = vmatpush.msra.mxu0 %v1334
    %1693 = vmatpush.msra.mxu0 %v1333
    %1694 = vmatmul.f32.gmra.mxu0 %v1676
    %v1695 = vpop.f32.mrf.mxu0
    %v1696 = vadd.f32 0.0, %v1695
    %1697 = vdwg.mxu0
    %v1699 = vrot.slane %v1696, 6
    %v1701 = vadd.f32 %v1331, %v1699
    %v1702 = vxor.u32 %v1701, 2147483648
    %v1703 = vmul.f32 %v1702, 1.442695
    %v1704 = vpow.pop %v1703
    %v1705 = vadd.f32 %v1704, 1.0
    %v1706 = vrcp.pop %v1705
    %v1707 = vmul.f32 %v1705, %v1706
    %v1708 = vsub.f32 1.0, %v1707
    %v1709 = vmul.f32 %v1706, %v1708
    %v1710 = vadd.f32 %v1706, %v1709
    %vm1711 = vweird.f32 %v1705
    %vm1712 = vweird.f32 %v1706
    %vm1713 = vmor %vm1711, %vm1712
    %v1714 = vsel %vm1713, %v1706, %v1710
    %v1715 = vand.u32 2147483647, %v1705
    %vm1716 = vcmp.eq.f32.partialorder %v1715, 8.507059e+37
    %v1717 = vand.u32 %v1705, 2147483648
    %v1718 = vor.u32 1.1754944e-38, %v1717
    %v1719 = vsel %vm1716, %v1718, %v1714
    %v1720 = vmul.f32 1.0, %v1719
    %v1721 = vtanh.pop %v1701
    %v1723 = vrot.slane %v1666, 6
    %v1725 = vmul.f32 %v1720, %v1723
    %1727 = vrot.lane.b32.xlu0 %v1721, 64
    %v1728 = vpop.permute.xlu0 %1727
    %v1730 = vmul.f32 %v1720, %v1728
    %1732 = vrot.lane.b32.xlu0 %v1730, 32
    %v1733 = vpop.permute.xlu0 %1732
    %v1735 = vadd.f32 %v1725, %v1733
    %v1736 = vtanh.pop %v1735
    %1738 = vrot.lane.b32.xlu0 %v1736, 64
    %v1739 = vpop.permute.xlu0 %1738
    %v1741 = vmul.f32 %v1720, %v1739
    %v1743 = vrot.slane %v1741, 2
    %1744 = vrot.lane.b32.xlu0 %v1743, 32
    %v1745 = vpop.permute.xlu0 %1744
    %v1746 = vsel %vm259, %v1745, 0
    %1748 = vmatpush.msra.mxu0 0.0
    %1749 = vmatpush.msra.mxu0 0.0
    %1750 = vmatpush.msra.mxu0 0.0
    %1751 = vmatpush.msra.mxu0 0.0
    %1752 = vmatpush.msra.mxu0 0.0
    %1753 = vmatpush.msra.mxu0 0.0
    %1754 = vmatpush.msra.mxu0 0.0
    %1755 = vmatpush.msra.mxu0 0.0
    %1756 = vmatpush.msra.mxu0 0.0
    %1757 = vmatpush.msra.mxu0 0.0
    %1758 = vmatpush.msra.mxu0 0.0
    %1759 = vmatpush.msra.mxu0 0.0
    %1760 = vmatpush.msra.mxu0 %v1336
    %1761 = vmatpush.msra.mxu0 %v1335
    %1762 = vmatpush.msra.mxu0 %v1334
    %1763 = vmatpush.msra.mxu0 %v1333
    %1764 = vmatmul.f32.gmra.mxu0 %v1746
    %v1765 = vpop.f32.mrf.mxu0
    %v1766 = vadd.f32 0.0, %v1765
    %1767 = vdwg.mxu0
    %v1769 = vrot.slane %v1766, 4
    %v1771 = vadd.f32 %v1331, %v1769
    %v1772 = vxor.u32 %v1771, 2147483648
    %v1773 = vmul.f32 %v1772, 1.442695
    %v1774 = vpow.pop %v1773
    %v1775 = vadd.f32 %v1774, 1.0
    %v1776 = vrcp.pop %v1775
    %v1777 = vmul.f32 %v1775, %v1776
    %v1778 = vsub.f32 1.0, %v1777
    %v1779 = vmul.f32 %v1776, %v1778
    %v1780 = vadd.f32 %v1776, %v1779
    %vm1781 = vweird.f32 %v1775
    %vm1782 = vweird.f32 %v1776
    %vm1783 = vmor %vm1781, %vm1782
    %v1784 = vsel %vm1783, %v1776, %v1780
    %v1785 = vand.u32 2147483647, %v1775
    %vm1786 = vcmp.eq.f32.partialorder %v1785, 8.507059e+37
    %v1787 = vand.u32 %v1775, 2147483648
    %v1788 = vor.u32 1.1754944e-38, %v1787
    %v1789 = vsel %vm1786, %v1788, %v1784
    %v1790 = vmul.f32 1.0, %v1789
    %v1791 = vtanh.pop %v1771
    %v1793 = vrot.slane %v1735, 6
    %v1795 = vmul.f32 %v1790, %v1793
    %1797 = vrot.lane.b32.xlu0 %v1791, 64
    %v1798 = vpop.permute.xlu0 %1797
    %v1800 = vmul.f32 %v1790, %v1798
    %1802 = vrot.lane.b32.xlu0 %v1800, 32
    %v1803 = vpop.permute.xlu0 %1802
    %v1805 = vadd.f32 %v1795, %v1803
    %v1806 = vtanh.pop %v1805
    %1808 = vrot.lane.b32.xlu0 %v1806, 64
    %v1809 = vpop.permute.xlu0 %1808
    %v1811 = vmul.f32 %v1790, %v1809
    %v1813 = vrot.slane %v1811, 4
    %1814 = vrot.lane.b32.xlu0 %v1813, 32
    %v1815 = vpop.permute.xlu0 %1814
    %v1816 = vsel %vm259, %v1815, 0
    %1818 = vmatpush.msra.mxu0 0.0
    %1819 = vmatpush.msra.mxu0 0.0
    %1820 = vmatpush.msra.mxu0 0.0
    %1821 = vmatpush.msra.mxu0 0.0
    %1822 = vmatpush.msra.mxu0 0.0
    %1823 = vmatpush.msra.mxu0 0.0
    %1824 = vmatpush.msra.mxu0 0.0
    %1825 = vmatpush.msra.mxu0 0.0
    %1826 = vmatpush.msra.mxu0 0.0
    %1827 = vmatpush.msra.mxu0 0.0
    %1828 = vmatpush.msra.mxu0 0.0
    %1829 = vmatpush.msra.mxu0 0.0
    %1830 = vmatpush.msra.mxu0 %v1336
    %1831 = vmatpush.msra.mxu0 %v1335
    %1832 = vmatpush.msra.mxu0 %v1334
    %1833 = vmatpush.msra.mxu0 %v1333
    %1834 = vmatmul.f32.gmra.mxu0 %v1816
    %v1835 = vpop.f32.mrf.mxu0
    %v1836 = vadd.f32 0.0, %v1835
    %1837 = vdwg.mxu0
    %v1839 = vrot.slane %v1836, 2
    %v1841 = vadd.f32 %v1331, %v1839
    %v1842 = vxor.u32 %v1841, 2147483648
    %v1843 = vmul.f32 %v1842, 1.442695
    %v1844 = vpow.pop %v1843
    %v1845 = vadd.f32 %v1844, 1.0
    %v1846 = vrcp.pop %v1845
    %v1847 = vmul.f32 %v1845, %v1846
    %v1848 = vsub.f32 1.0, %v1847
    %v1849 = vmul.f32 %v1846, %v1848
    %v1850 = vadd.f32 %v1846, %v1849
    %vm1851 = vweird.f32 %v1845
    %vm1852 = vweird.f32 %v1846
    %vm1853 = vmor %vm1851, %vm1852
    %v1854 = vsel %vm1853, %v1846, %v1850
    %v1855 = vand.u32 2147483647, %v1845
    %vm1856 = vcmp.eq.f32.partialorder %v1855, 8.507059e+37
    %v1857 = vand.u32 %v1845, 2147483648
    %v1858 = vor.u32 1.1754944e-38, %v1857
    %v1859 = vsel %vm1856, %v1858, %v1854
    %v1860 = vmul.f32 1.0, %v1859
    %v1861 = vtanh.pop %v1841
    %v1863 = vrot.slane %v1805, 6
    %v1865 = vmul.f32 %v1860, %v1863
    %1867 = vrot.lane.b32.xlu0 %v1861, 64
    %v1868 = vpop.permute.xlu0 %1867
    %v1870 = vmul.f32 %v1860, %v1868
    %1872 = vrot.lane.b32.xlu0 %v1870, 32
    %v1873 = vpop.permute.xlu0 %1872
    %v1875 = vadd.f32 %v1865, %v1873
    %v1876 = vtanh.pop %v1875
    %1878 = vrot.lane.b32.xlu0 %v1876, 64
    %v1879 = vpop.permute.xlu0 %1878
    %v1881 = vmul.f32 %v1860, %v1879
    %v1882 = vld [vmem:[%s9] sm:$0xff]
    %v1883 = vld [vmem:[%s9 + $0x8] sm:$0xff]
    %v1884 = vld [vmem:[%s9 + $0x10] sm:$0xff]
    %v1885 = vld [vmem:[%s9 + $0x18] sm:$0xff]
    %v1886 = vld [vmem:[%s9 + $0x20] sm:$0xff]
    %v1887 = vld [vmem:[%s9 + $0x28] sm:$0xff]
    %v1888 = vld [vmem:[%s9 + $0x30] sm:$0xff]
    %v1889 = vld [vmem:[%s9 + $0x38] sm:$0xff]
    %v1890 = vld [vmem:[%s10] sm:$0x1]
    %v1892 = vperm.slane %v1890, 0
    %v1894 = vrot.slane %v1291, 6
    %v1895 = vsel %vm131, %v1894, 0
    %1897 = vmatpush.msra.mxu0 0.0
    %1898 = vmatpush.msra.mxu0 0.0
    %1899 = vmatpush.msra.mxu0 0.0
    %1900 = vmatpush.msra.mxu0 0.0
    %1901 = vmatpush.msra.mxu0 0.0
    %1902 = vmatpush.msra.mxu0 0.0
    %1903 = vmatpush.msra.mxu0 0.0
    %1904 = vmatpush.msra.mxu0 0.0
    %1905 = vmatpush.msra.mxu0 %v1889
    %1906 = vmatpush.msra.mxu0 %v1888
    %1907 = vmatpush.msra.mxu0 %v1887
    %1908 = vmatpush.msra.mxu0 %v1886
    %1909 = vmatpush.msra.mxu0 %v1885
    %1910 = vmatpush.msra.mxu0 %v1884
    %1911 = vmatpush.msra.mxu0 %v1883
    %1912 = vmatpush.msra.mxu0 %v1882
    %1913 = vmatmul.f32.gmra.mxu0 %v1895
    %v1914 = vpop.f32.mrf.mxu0
    %v1915 = vadd.f32 %v1892, %v1914
    %1916 = vdwg.mxu0
    %v1917 = vxor.u32 %v1915, 2147483648
    %v1918 = vmul.f32 %v1917, 1.442695
    %v1919 = vpow.pop %v1918
    %v1920 = vadd.f32 %v1919, 1.0
    %v1921 = vrcp.pop %v1920
    %v1922 = vmul.f32 %v1920, %v1921
    %v1923 = vsub.f32 1.0, %v1922
    %v1924 = vmul.f32 %v1921, %v1923
    %v1925 = vadd.f32 %v1921, %v1924
    %vm1926 = vweird.f32 %v1920
    %vm1927 = vweird.f32 %v1921
    %vm1928 = vmor %vm1926, %vm1927
    %v1929 = vsel %vm1928, %v1921, %v1925
    %v1930 = vand.u32 2147483647, %v1920
    %vm1931 = vcmp.eq.f32.partialorder %v1930, 8.507059e+37
    %v1932 = vand.u32 %v1920, 2147483648
    %v1933 = vor.u32 1.1754944e-38, %v1932
    %v1934 = vsel %vm1931, %v1933, %v1929
    %v1935 = vmul.f32 1.0, %v1934
    %v1936 = vtanh.pop %v1915
    %v1937 = vmul.f32 %v1935, 0.0
    %1939 = vrot.lane.b32.xlu0 %v1936, 64
    %v1940 = vpop.permute.xlu0 %1939
    %v1942 = vmul.f32 %v1935, %v1940
    %1944 = vrot.lane.b32.xlu0 %v1942, 32
    %v1945 = vpop.permute.xlu0 %1944
    %v1947 = vadd.f32 %v1937, %v1945
    %v1948 = vtanh.pop %v1947
    %1950 = vrot.lane.b32.xlu0 %v1948, 64
    %v1951 = vpop.permute.xlu0 %1950
    %v1953 = vmul.f32 %v1935, %v1951
    %1955 = vrot.lane.b32.xlu0 %v1881, 32
    %v1956 = vpop.permute.xlu0 %1955
    %v1959 = vrot.slane %v1953, 2
    %1960 = vrot.lane.b32.xlu0 %v1959, 64
    %v1961 = vpop.permute.xlu0 %1960
    %v1963 = vsel %vm259, %v1956, %v1961
    %v1964 = vld [vmem:[%s11] sm:$0xff]
    %v1965 = vld [vmem:[%s11 + $0x8] sm:$0xff]
    %v1966 = vld [vmem:[%s11 + $0x10] sm:$0xff]
    %v1967 = vld [vmem:[%s11 + $0x18] sm:$0xff]
    %v1968 = vld [vmem:[%s11 + $0x20] sm:$0xff]
    %v1969 = vld [vmem:[%s11 + $0x28] sm:$0xff]
    %v1970 = vld [vmem:[%s11 + $0x30] sm:$0xff]
    %v1971 = vld [vmem:[%s11 + $0x38] sm:$0xff]
    %v1972 = vld [vmem:[%s12] sm:$0x1]
    %v1974 = vperm.slane %v1972, 0
    %v1977 = vrot.slane %v1963, 6
    %v1978 = vsel %vm131, %v1977, 0
    %1980 = vmatpush.msra.mxu0 0.0
    %1981 = vmatpush.msra.mxu0 0.0
    %1982 = vmatpush.msra.mxu0 0.0
    %1983 = vmatpush.msra.mxu0 0.0
    %1984 = vmatpush.msra.mxu0 0.0
    %1985 = vmatpush.msra.mxu0 0.0
    %1986 = vmatpush.msra.mxu0 0.0
    %1987 = vmatpush.msra.mxu0 0.0
    %1988 = vmatpush.msra.mxu0 %v1971
    %1989 = vmatpush.msra.mxu0 %v1970
    %1990 = vmatpush.msra.mxu0 %v1969
    %1991 = vmatpush.msra.mxu0 %v1968
    %1992 = vmatpush.msra.mxu0 %v1967
    %1993 = vmatpush.msra.mxu0 %v1966
    %1994 = vmatpush.msra.mxu0 %v1965
    %1995 = vmatpush.msra.mxu0 %v1964
    %1996 = vmatmul.f32.gmra.mxu0 %v1978
    %v1997 = vpop.f32.mrf.mxu0
    %v1998 = vadd.f32 %v1974, %v1997
    %1999 = vdwg.mxu0
    %vm2000 = vcmask 58368
    %2001 = vst.msk [vmem:[#allocation2] sm:$0x3] %vm2000, %v1998
    // Predicated region
    $region54: #{bicustom_lstm_forward.1} parent=1 // pred_check
      _
    $region55: #{bicustom_lstm_forward.1} parent=1 // pred_check_branch
      %2003 = sbr.rel (0) target = $region57
    $region56: #{bicustom_lstm_forward.1} parent=1 // pred_region
      %2005 = vsyncadd [#allocation3], 0
      %s2007 = sshll.u32 [#allocation2], 4
      %s2008 = int_to_ptr.vmem [resolvable:$true] %s2007
      %s2009 = sshll.u32 %s13, 4
      %s2010 = int_to_ptr.hbm [resolvable:$true] %s2009
      %2012 = dma.vmem_to_hbm [thread:$0]  %s2008, 32, %s2010, [#allocation3]
    $region57: #{bicustom_lstm_forward.1} parent=1 // pred_fallthru
      _
    // Predicated region
    $region58: #{bicustom_lstm_forward.1} parent=1 // pred_check
      _
    $region59: #{bicustom_lstm_forward.1} parent=1 // pred_check_branch
      %2014 = sbr.rel (0) target = $region61
    $region60: #{bicustom_lstm_forward.1} parent=1 // pred_region
      %2016 = dma.done [#allocation3], 32
    $region61: #{bicustom_lstm_forward.1} parent=1 // pred_fallthru
      _
    %2017 = vsyncpa [#allocation3], 1

</llo_original>
